<compile_context>
chip_gen: v7x
topology: tpu7x:2x2x1
jax: 0.10.0
libtpu: 0.0.40
codegen_flags: <defaults>
</compile_context>

<pallas_src>
import functools

import jax
import jax.numpy as jnp
from jax.experimental import pallas as pl
from jax.experimental.pallas import tpu as pltpu


def _round_up(x, m):
    return (x + m - 1) // m * m


# ----------------------------------------------------------------------------
# Fused kernel: im2col conv (all filters) + tanh + piecewise pool + FC + softmax
# ----------------------------------------------------------------------------
def _fused_forward_kernel(lo_ref, hi_ref,            # (1, 3*tb_pad, 1) int32 pool bounds
                          wa_ref, e_ref,             # per-step activations
                          wconv_ref, bconv_ref,      # fused conv weight / bias
                          wfc_ref, fcb_ref,          # fused FC weight / bias
                          out_ref,                   # (1, tb, r_pad) f32
                          xcol_ref,                  # (tb, S, k_max*c_pad) bf16 scratch
                          *, tb, tb_pad, seq_len, c_pad, k_max):
    l_out = seq_len                       # odd kernel sizes with padding = k//2
    pad = k_max // 2
    n_rows = tb * l_out

    # ---- im2col unfold: k_max bulk, lane-aligned tap writes (all samples at
    # once).  Only the small zero-padding strips are cleared; the interior is
    # fully overwritten every step.
    for j in range(k_max):
        t_lo = max(0, pad - j)
        t_hi = min(l_out, l_out + pad - j)
        s_lo = t_lo + j - pad
        s_hi = t_hi + j - pad
        c0, c1 = j * c_pad, (j + 1) * c_pad
        if t_lo > 0:
            xcol_ref[:, 0:t_lo, c0:c1] = jnp.zeros((tb, t_lo, c_pad),
                                                   jnp.bfloat16)
        if t_hi < l_out:
            xcol_ref[:, t_hi:l_out, c0:c1] = jnp.zeros((tb, l_out - t_hi, c_pad),
                                                       jnp.bfloat16)
        xcol_ref[:, t_lo:t_hi, c0:c1] = wa_ref[0, :, s_lo:s_hi, :]

    # ---- both Conv1d branches as one bf16 MXU matmul (f32 acc) + bias + tanh.
    # seq_len is a multiple of the bf16 sublane tile here, so this reshape is a
    # pure re-labeling (no relayout).
    x = xcol_ref[...].reshape(n_rows, k_max * c_pad)
    acc = jnp.dot(x, wconv_ref[...], preferred_element_type=jnp.float32)
    acc = jnp.tanh(acc + bconv_ref[...])              # (n_rows, n_pad) f32

    # ---- piecewise adaptive-avg-pool(1): ONE block-diagonal mask matmul for
    # all 3 segments of all samples.  Mask built from a single iota comparison
    # against per-row [lo, hi) column bounds (no integer division).
    lo = lo_ref[0]                                    # (3*tb_pad, 1) int32
    hi = hi_ref[0]
    col = jax.lax.broadcasted_iota(jnp.int32, (3 * tb_pad, n_rows), 1)
    mask = ((col >= lo) & (col < hi)).astype(jnp.float32)
    cnt = (hi - lo).astype(jnp.float32)
    inv = jnp.where(cnt > 0.0, pl.reciprocal(cnt, approx=True), 0.0)
    # TODO(synk): the original PyTorch has a buggy `dis2 > seq_len - 1` branch
    # that leaves part3 = None (crashes); empty segments here pool to 0 instead.
    p_all = jnp.dot(mask, acc, preferred_element_type=jnp.float32) * inv

    # ---- lane-dense feature [e | seg0 | seg1 | seg2] and a single FC matmul.
    feat = jnp.concatenate(
        [e_ref[0],
         p_all[0:tb],
         p_all[tb_pad:tb_pad + tb],
         p_all[2 * tb_pad:2 * tb_pad + tb]], axis=-1)  # (tb, e_pad + 3*n_pad)
    logits = jnp.dot(feat, wfc_ref[...],
                     preferred_element_type=jnp.float32) + fcb_ref[...]

    # ---- exact softmax (padded bias lanes are -1e30 -> exp underflows to 0)
    mx = jnp.max(logits, axis=-1, keepdims=True)
    ex = jnp.exp(logits - mx)
    out_ref[0] = ex / jnp.sum(ex, axis=-1, keepdims=True)


def fused_forward(prep, dims, wa, e_feat, d1, d2, *, n_steps=1):
    """wa: (B, S, c_pad) bf16; e_feat: (B, e_pad) f32; d1/d2: (B,) int32."""
    B, seq_len, c_pad = wa.shape
    assert B % n_steps == 0
    tb = B // n_steps
    tb_pad = _round_up(tb, 8)
    k_max = dims["k_max"]
    e_pad = e_feat.shape[1]
    r_pad = prep["fcb"].shape[1]

    wa_g = wa.reshape(n_steps, tb, seq_len, c_pad)
    e_g = e_feat.reshape(n_steps, tb, e_pad)

    # Per-(segment, sample) pooling column bounds in the stacked (segment-major,
    # sublane-padded) row layout used by the in-kernel pooling matmul.  Tiny
    # O(B) int ops that ride along with the wrapper's concat/pad glue.
    d1s = d1.reshape(n_steps, tb)
    d2s = d2.reshape(n_steps, tb)
    base = (jnp.arange(tb, dtype=jnp.int32) * seq_len)[None, :]
    lo = jnp.stack([jnp.zeros_like(d1s), d1s, d2s], axis=1) + base[:, None, :]
    hi = jnp.stack([d1s, d2s, jnp.full_like(d1s, seq_len)], axis=1) + base[:, None, :]
    pad_b = tb_pad - tb
    if pad_b:                                   # padded rows: lo=hi=0 -> empty
        lo = jnp.pad(lo, ((0, 0), (0, 0), (0, pad_b)))
        hi = jnp.pad(hi, ((0, 0), (0, 0), (0, pad_b)))
    lo = lo.reshape(n_steps, 3 * tb_pad, 1).astype(jnp.int32)
    hi = hi.reshape(n_steps, 3 * tb_pad, 1).astype(jnp.int32)

    kernel = functools.partial(_fused_forward_kernel, tb=tb, tb_pad=tb_pad,
                               seq_len=seq_len, c_pad=c_pad, k_max=k_max)

    out = pl.pallas_call(
        kernel,
        out_shape=jax.ShapeDtypeStruct((n_steps, tb, r_pad), jnp.float32),
        grid=(n_steps,),
        in_specs=[
            pl.BlockSpec((1, 3 * tb_pad, 1), lambda i: (i, 0, 0)),
            pl.BlockSpec((1, 3 * tb_pad, 1), lambda i: (i, 0, 0)),
            pl.BlockSpec((1, tb, seq_len, c_pad), lambda i: (i, 0, 0, 0)),
            pl.BlockSpec((1, tb, e_pad), lambda i: (i, 0, 0)),
            pl.BlockSpec(prep["w_comb"].shape, lambda i: (0, 0)),
            pl.BlockSpec(prep["b_comb"].shape, lambda i: (0, 0)),
            pl.BlockSpec(prep["w_fc"].shape, lambda i: (0, 0)),
            pl.BlockSpec(prep["fcb"].shape, lambda i: (0, 0)),
        ],
        out_specs=pl.BlockSpec((1, tb, r_pad), lambda i: (i, 0, 0)),
        scratch_shapes=[
            pltpu.VMEM((tb, seq_len, k_max * c_pad), jnp.bfloat16)],
        compiler_params=pltpu.CompilerParams(
            dimension_semantics=("arbitrary",)),
    )(lo, hi, wa_g, e_g, prep["w_comb"], prep["b_comb"],
      prep["w_fc"], prep["fcb"])
    return out.reshape(B, r_pad)


# ----------------------------------------------------------------------------
# Full forward pass (glue in plain JAX: embedding gather + concat/pad only)
# ----------------------------------------------------------------------------
def cnn_forward(prep, W, W_pos1, W_pos2, e1, e2, e1_p, e2_p, *,
                dims, n_rel, n_steps=1):
    # embedding gathers + concat stay in XLA (tiny tables; no Pallas gather win)
    pos1 = jnp.take(prep["pos_emb1"], W_pos1, axis=0).astype(jnp.float32)
    pos2 = jnp.take(prep["pos_emb2"], W_pos2, axis=0).astype(jnp.float32)
    wa = jnp.concatenate([W, pos1, pos2], axis=2)
    c_in = wa.shape[2]
    c_pad = dims["c_pad"]
    if c_pad > c_in:
        wa = jnp.pad(wa, ((0, 0), (0, 0), (0, c_pad - c_in)))
    wa = wa.astype(jnp.bfloat16)

    e_feat = jnp.concatenate([e1, e2], axis=1).astype(jnp.float32)
    e_pad = dims["e_pad"]
    if e_pad > e_feat.shape[1]:
        e_feat = jnp.pad(e_feat, ((0, 0), (0, e_pad - e_feat.shape[1])))

    d1 = jnp.minimum(e1_p, e2_p).astype(jnp.int32)
    d2 = jnp.maximum(e1_p, e2_p).astype(jnp.int32)

    # dropout: identity at inference time
    out = fused_forward(prep, dims, wa, e_feat, d1, d2, n_steps=n_steps)
    return out[:, :n_rel]


# ----------------------------------------------------------------------------
# One-time parameter preparation (hoisted out of the per-forward hot path)
# ----------------------------------------------------------------------------
def prepare_params(params, *, kernel_sizes, dw, dc, vac_len_rel):
    c_in = params["convs"][0][0].shape[1]
    nks = len(kernel_sizes)
    k_max = max(kernel_sizes)
    assert all(k % 2 == 1 for k in kernel_sizes), "odd kernel sizes required"
    pad_max = k_max // 2
    R = vac_len_rel
    c_pad = _round_up(c_in, 128)       # lane-aligned im2col tap blocks
    n_real = nks * dc
    n_pad = _round_up(n_real, 128)     # lane-dense conv/pool width
    e_real = 2 * dw
    e_pad = _round_up(e_real, 128)
    r_pad = _round_up(R, 128)          # lane-dense softmax output

    # fused conv weight: W[(j*c_pad + ci), f*dc + o] = cw_f[o, ci, j - off_f]
    w3 = jnp.zeros((k_max, c_pad, n_pad), jnp.float32)
    b_comb = jnp.zeros((1, n_pad), jnp.float32)
    for f, (k, (cw, cb)) in enumerate(zip(kernel_sizes, params["convs"])):
        off = pad_max - k // 2
        w3 = w3.at[off:off + k, :c_in, f * dc:(f + 1) * dc].set(
            jnp.transpose(cw, (2, 1, 0)))
        b_comb = b_comb.at[0, f * dc:(f + 1) * dc].set(cb)
    w_comb = w3.reshape(k_max * c_pad, n_pad).astype(jnp.bfloat16)

    # fused FC weight against the in-kernel feature layout
    # [e (e_pad lanes) | pooled seg0 (n_pad) | seg1 | seg2];
    # padded bias lanes carry -1e30 so the softmax ignores them.
    fc_w = params["fc_w"]
    fc_b = params["fc_b"]
    feat_pad = e_pad + 3 * n_pad
    w_fc = jnp.zeros((feat_pad, r_pad), jnp.float32)
    w_fc = w_fc.at[:e_real, :R].set(fc_w[:, :e_real].T)
    fc_conv = fc_w[:, e_real:].reshape(R, n_real, 3)
    for s in range(3):
        w_fc = w_fc.at[e_pad + s * n_pad:e_pad + s * n_pad + n_real, :R].set(
            fc_conv[:, :, s].T)
    fcb = jnp.full((1, r_pad), -1e30, jnp.float32).at[0, :R].set(fc_b)

    prep = {
        "pos_emb1": params["pos_emb1"], "pos_emb2": params["pos_emb2"],
        "w_comb": w_comb, "b_comb": b_comb, "w_fc": w_fc, "fcb": fcb,
    }
    dims = {"c_pad": c_pad, "e_pad": e_pad, "n_pad": n_pad,
            "r_pad": r_pad, "k_max": k_max}
    return prep, dims


# ----------------------------------------------------------------------------
# Deterministic parameter initialization (shapes per CNN.__init__)
# ----------------------------------------------------------------------------
def init_params(key, *, dw, dp, dc, vac_len_pos, vac_len_rel, kernel_sizes):
    c_in = 3 * dw + 2 * dp
    fc_in = 3 * dc * len(kernel_sizes) + 2 * dw
    keys = jax.random.split(key, 4 + 2 * len(kernel_sizes))
    params = {
        "pos_emb1": 0.1 * jax.random.normal(keys[0], (vac_len_pos, dp), jnp.float32),
        "pos_emb2": 0.1 * jax.random.normal(keys[1], (vac_len_pos, dp), jnp.float32),
        "fc_w": 0.1 * jax.random.normal(keys[2], (vac_len_rel, fc_in), jnp.float32),
        "fc_b": 0.1 * jax.random.normal(keys[3], (vac_len_rel,), jnp.float32),
        "convs": [],
    }
    for i, k in enumerate(kernel_sizes):
        cw = 0.1 * jax.random.normal(keys[4 + 2 * i], (dc, c_in, k), jnp.float32)
        cb = 0.1 * jax.random.normal(keys[5 + 2 * i], (dc,), jnp.float32)
        params["convs"].append((cw, cb))
    return params


# ----------------------------------------------------------------------------
# Pure-JAX reference (PyTorch semantics, same bf16 conv precision choices)
# ----------------------------------------------------------------------------
def reference_forward(params, W, W_pos1, W_pos2, e1, e2, e1_p, e2_p, *, seq_len):
    pos1 = jnp.take(params["pos_emb1"], W_pos1, axis=0).astype(jnp.float32)
    pos2 = jnp.take(params["pos_emb2"], W_pos2, axis=0).astype(jnp.float32)
    wa = jnp.concatenate([W, pos1, pos2], axis=2)
    B = wa.shape[0]
    pooled_list = []
    for (cw, cb) in params["convs"]:
        dc, _, k = cw.shape
        pad = k // 2
        wa_p = jnp.pad(wa, ((0, 0), (pad, pad), (0, 0)))
        acc = jnp.zeros((B, seq_len, dc), jnp.float32)
        for j in range(k):
            xj = wa_p[:, j:j + seq_len, :].astype(jnp.bfloat16)
            wj = cw[:, :, j].T.astype(jnp.bfloat16)
            acc = acc + jnp.einsum("bsc,cd->bsd", xj, wj,
                                   preferred_element_type=jnp.float32)
        conv = jnp.tanh(acc + cb)                       # (B, S, dc)
        rows = []
        for b in range(B):
            d1 = int(jnp.minimum(e1_p[b], e2_p[b]))
            d2 = int(jnp.maximum(e1_p[b], e2_p[b]))

            def seg(lo, hi):
                if hi <= lo:
                    return jnp.zeros((dc,), jnp.float32)
                return jnp.mean(conv[b, lo:hi, :], axis=0)

            rows.append(jnp.stack([seg(0, d1), seg(d1, d2), seg(d2, seq_len)],
                                  axis=1))              # (dc, 3)
        pooled_list.append(jnp.stack(rows, axis=0))     # (B, dc, 3)
    convcat = jnp.concatenate(pooled_list, axis=1)      # (B, nks*dc, 3)
    feat = jnp.concatenate([e1, e2, convcat.reshape(B, -1)], axis=1)
    logits = feat @ params["fc_w"].T + params["fc_b"]
    return jax.nn.softmax(logits, axis=1)


if __name__ == "__main__":
    # small config consistent with the module
    B, seq_len = 4, 16
    dw, dp, dc = 16, 8, 32
    vac_len_pos, vac_len_rel = 40, 10
    kernel_sizes = (3, 5)

    key = jax.random.PRNGKey(0)
    kp, kW, kp1, kp2, ke1, ke2, kep1, kep2 = jax.random.split(key, 8)

    params = init_params(kp, dw=dw, dp=dp, dc=dc, vac_len_pos=vac_len_pos,
                         vac_len_rel=vac_len_rel, kernel_sizes=kernel_sizes)
    prep, dims = prepare_params(params, kernel_sizes=kernel_sizes, dw=dw, dc=dc,
                                vac_len_rel=vac_len_rel)

    W = jax.random.normal(kW, (B, seq_len, 3 * dw), jnp.float32)
    W_pos1 = jax.random.randint(kp1, (B, seq_len), 0, vac_len_pos, jnp.int32)
    W_pos2 = jax.random.randint(kp2, (B, seq_len), 0, vac_len_pos, jnp.int32)
    e1 = jax.random.normal(ke1, (B, dw), jnp.float32)
    e2 = jax.random.normal(ke2, (B, dw), jnp.float32)
    # entity positions in [1, seq_len - 1] (valid, non-degenerate range)
    e1_p = jax.random.randint(kep1, (B,), 1, seq_len, jnp.int32)
    e2_p = jax.random.randint(kep2, (B,), 1, seq_len, jnp.int32)

    fwd = jax.jit(functools.partial(cnn_forward, dims=dims, n_rel=vac_len_rel))
    out = fwd(prep, W, W_pos1, W_pos2, e1, e2, e1_p, e2_p)
    out = jax.block_until_ready(out)

    ref = reference_forward(params, W, W_pos1, W_pos2, e1, e2, e1_p, e2_p,
                            seq_len=seq_len)

    assert out.shape == (B, vac_len_rel)
    assert bool(jnp.all(jnp.isfinite(out)))
    assert bool(jnp.allclose(jnp.sum(out, axis=1), 1.0, atol=1e-2))
    assert bool(jnp.allclose(out, ref, atol=1e-2))
    print("KERNEL_OK")
</pallas_src>

<mosaic_0001>
module attributes {stable_mosaic.version = 11 : i64} {
  func.func @_fused_forward_kernel(%arg0: i32, %arg1: memref<1x24x1xi32, #tpu.memory_space<vmem>>, %arg2: memref<1x24x1xi32, #tpu.memory_space<vmem>>, %arg3: memref<1x4x16x128xbf16, #tpu.memory_space<vmem>>, %arg4: memref<1x4x128xf32, #tpu.memory_space<vmem>>, %arg5: memref<640x128xbf16, #tpu.memory_space<vmem>>, %arg6: memref<1x128xf32, #tpu.memory_space<vmem>>, %arg7: memref<512x128xf32, #tpu.memory_space<vmem>>, %arg8: memref<1x128xf32, #tpu.memory_space<vmem>>, %arg9: memref<1x4x128xf32, #tpu.memory_space<vmem>>, %arg10: memref<4x16x640xbf16, #tpu.memory_space<vmem>>) attributes {dimension_semantics = [#tpu.dimension_semantics<arbitrary>], iteration_bounds = array<i64: 1>, scalar_prefetch = 0 : i64, scratch_operands = 1 : i64, tpu.core_type = #tpu.core_type<tc>, window_params = [{transform_indices = @transform_0, window_bounds = array<i64: 1, 24, 1>}, {transform_indices = @transform_1, window_bounds = array<i64: 1, 24, 1>}, {transform_indices = @transform_2, window_bounds = array<i64: 1, 4, 16, 128>}, {transform_indices = @transform_3, window_bounds = array<i64: 1, 4, 128>}, {pipeline_mode = #tpu.pipeline_mode<synchronous>, transform_indices = @transform_4, window_bounds = array<i64: 640, 128>}, {pipeline_mode = #tpu.pipeline_mode<synchronous>, transform_indices = @transform_5, window_bounds = array<i64: 1, 128>}, {pipeline_mode = #tpu.pipeline_mode<synchronous>, transform_indices = @transform_6, window_bounds = array<i64: 512, 128>}, {pipeline_mode = #tpu.pipeline_mode<synchronous>, transform_indices = @transform_7, window_bounds = array<i64: 1, 128>}, {transform_indices = @transform_8, window_bounds = array<i64: 1, 4, 128>}]} {
    %cst = arith.constant 0.000000e+00 : bf16
    %0 = vector.broadcast %cst : bf16 to vector<4x2x128xbf16>
    %c0 = arith.constant 0 : index
    %c0_0 = arith.constant 0 : index
    %c0_1 = arith.constant 0 : index
    %1 = vector.load %arg10[%c0, %c0_0, %c0_1] : memref<4x16x640xbf16, #tpu.memory_space<vmem>>, vector<4x2x128xbf16>
    tpu.vector_store %arg10[%c0, %c0_0, %c0_1], %0 {strides = array<i32>} : memref<4x16x640xbf16, #tpu.memory_space<vmem>>, vector<4x2x128xbf16>,
    %c0_2 = arith.constant 0 : index
    %c0_3 = arith.constant 0 : index
    %c0_4 = arith.constant 0 : index
    %c0_5 = arith.constant 0 : index
    %2 = vector.load %arg3[%c0_2, %c0_3, %c0_4, %c0_5] : memref<1x4x16x128xbf16, #tpu.memory_space<vmem>>, vector<1x4x14x128xbf16>
    %3 = vector.shape_cast %2 : vector<1x4x14x128xbf16> to vector<4x14x128xbf16>
    %c0_6 = arith.constant 0 : index
    %c2 = arith.constant 2 : index
    %c0_7 = arith.constant 0 : index
    %4 = vector.load %arg10[%c0_6, %c2, %c0_7] : memref<4x16x640xbf16, #tpu.memory_space<vmem>>, vector<4x14x128xbf16>
    tpu.vector_store %arg10[%c0_6, %c2, %c0_7], %3 {strides = array<i32>} : memref<4x16x640xbf16, #tpu.memory_space<vmem>>, vector<4x14x128xbf16>,
    %cst_8 = arith.constant 0.000000e+00 : bf16
    %5 = vector.broadcast %cst_8 : bf16 to vector<4x1x128xbf16>
    %c0_9 = arith.constant 0 : index
    %c0_10 = arith.constant 0 : index
    %c128 = arith.constant 128 : index
    %6 = vector.load %arg10[%c0_9, %c0_10, %c128] : memref<4x16x640xbf16, #tpu.memory_space<vmem>>, vector<4x1x128xbf16>
    tpu.vector_store %arg10[%c0_9, %c0_10, %c128], %5 {strides = array<i32>} : memref<4x16x640xbf16, #tpu.memory_space<vmem>>, vector<4x1x128xbf16>,
    %c0_11 = arith.constant 0 : index
    %c0_12 = arith.constant 0 : index
    %c0_13 = arith.constant 0 : index
    %c0_14 = arith.constant 0 : index
    %7 = vector.load %arg3[%c0_11, %c0_12, %c0_13, %c0_14] : memref<1x4x16x128xbf16, #tpu.memory_space<vmem>>, vector<1x4x15x128xbf16>
    %8 = vector.shape_cast %7 : vector<1x4x15x128xbf16> to vector<4x15x128xbf16>
    %c0_15 = arith.constant 0 : index
    %c1 = arith.constant 1 : index
    %c128_16 = arith.constant 128 : index
    %9 = vector.load %arg10[%c0_15, %c1, %c128_16] : memref<4x16x640xbf16, #tpu.memory_space<vmem>>, vector<4x15x128xbf16>
    tpu.vector_store %arg10[%c0_15, %c1, %c128_16], %8 {strides = array<i32>} : memref<4x16x640xbf16, #tpu.memory_space<vmem>>, vector<4x15x128xbf16>,
    %c0_17 = arith.constant 0 : index
    %c0_18 = arith.constant 0 : index
    %c0_19 = arith.constant 0 : index
    %c0_20 = arith.constant 0 : index
    %10 = vector.load %arg3[%c0_17, %c0_18, %c0_19, %c0_20] : memref<1x4x16x128xbf16, #tpu.memory_space<vmem>>, vector<1x4x16x128xbf16>
    %11 = vector.shape_cast %10 : vector<1x4x16x128xbf16> to vector<4x16x128xbf16>
    %c0_21 = arith.constant 0 : index
    %c0_22 = arith.constant 0 : index
    %c256 = arith.constant 256 : index
    %12 = vector.load %arg10[%c0_21, %c0_22, %c256] : memref<4x16x640xbf16, #tpu.memory_space<vmem>>, vector<4x16x128xbf16>
    tpu.vector_store %arg10[%c0_21, %c0_22, %c256], %11 {strides = array<i32>} : memref<4x16x640xbf16, #tpu.memory_space<vmem>>, vector<4x16x128xbf16>,
    %cst_23 = arith.constant 0.000000e+00 : bf16
    %13 = vector.broadcast %cst_23 : bf16 to vector<4x1x128xbf16>
    %c0_24 = arith.constant 0 : index
    %c15 = arith.constant 15 : index
    %c384 = arith.constant 384 : index
    %14 = vector.load %arg10[%c0_24, %c15, %c384] : memref<4x16x640xbf16, #tpu.memory_space<vmem>>, vector<4x1x128xbf16>
    tpu.vector_store %arg10[%c0_24, %c15, %c384], %13 {strides = array<i32>} : memref<4x16x640xbf16, #tpu.memory_space<vmem>>, vector<4x1x128xbf16>,
    %c0_25 = arith.constant 0 : index
    %c0_26 = arith.constant 0 : index
    %c1_27 = arith.constant 1 : index
    %c0_28 = arith.constant 0 : index
    %15 = vector.load %arg3[%c0_25, %c0_26, %c1_27, %c0_28] : memref<1x4x16x128xbf16, #tpu.memory_space<vmem>>, vector<1x4x15x128xbf16>
    %16 = vector.shape_cast %15 : vector<1x4x15x128xbf16> to vector<4x15x128xbf16>
    %c0_29 = arith.constant 0 : index
    %c0_30 = arith.constant 0 : index
    %c384_31 = arith.constant 384 : index
    %17 = vector.load %arg10[%c0_29, %c0_30, %c384_31] : memref<4x16x640xbf16, #tpu.memory_space<vmem>>, vector<4x15x128xbf16>
    tpu.vector_store %arg10[%c0_29, %c0_30, %c384_31], %16 {strides = array<i32>} : memref<4x16x640xbf16, #tpu.memory_space<vmem>>, vector<4x15x128xbf16>,
    %cst_32 = arith.constant 0.000000e+00 : bf16
    %18 = vector.broadcast %cst_32 : bf16 to vector<4x2x128xbf16>
    %c0_33 = arith.constant 0 : index
    %c14 = arith.constant 14 : index
    %c512 = arith.constant 512 : index
    %19 = vector.load %arg10[%c0_33, %c14, %c512] : memref<4x16x640xbf16, #tpu.memory_space<vmem>>, vector<4x2x128xbf16>
    tpu.vector_store %arg10[%c0_33, %c14, %c512], %18 {strides = array<i32>} : memref<4x16x640xbf16, #tpu.memory_space<vmem>>, vector<4x2x128xbf16>,
    %c0_34 = arith.constant 0 : index
    %c0_35 = arith.constant 0 : index
    %c2_36 = arith.constant 2 : index
    %c0_37 = arith.constant 0 : index
    %20 = vector.load %arg3[%c0_34, %c0_35, %c2_36, %c0_37] : memref<1x4x16x128xbf16, #tpu.memory_space<vmem>>, vector<1x4x14x128xbf16>
    %21 = vector.shape_cast %20 : vector<1x4x14x128xbf16> to vector<4x14x128xbf16>
    %c0_38 = arith.constant 0 : index
    %c0_39 = arith.constant 0 : index
    %c512_40 = arith.constant 512 : index
    %22 = vector.load %arg10[%c0_38, %c0_39, %c512_40] : memref<4x16x640xbf16, #tpu.memory_space<vmem>>, vector<4x14x128xbf16>
    tpu.vector_store %arg10[%c0_38, %c0_39, %c512_40], %21 {strides = array<i32>} : memref<4x16x640xbf16, #tpu.memory_space<vmem>>, vector<4x14x128xbf16>,
    %c0_41 = arith.constant 0 : index
    %c0_42 = arith.constant 0 : index
    %c0_43 = arith.constant 0 : index
    %23 = vector.load %arg10[%c0_41, %c0_42, %c0_43] : memref<4x16x640xbf16, #tpu.memory_space<vmem>>, vector<4x16x640xbf16>
    %24 = vector.shape_cast %23 : vector<4x16x640xbf16> to vector<64x640xbf16>
    %c0_44 = arith.constant 0 : index
    %c0_45 = arith.constant 0 : index
    %25 = vector.load %arg5[%c0_44, %c0_45] : memref<640x128xbf16, #tpu.memory_space<vmem>>, vector<640x128xbf16>
    %cst_46 = arith.constant dense<0.000000e+00> : vector<64x128xf32>
    %26 = tpu.matmul %24, %25, %cst_46 {dimension_numbers = #tpu.dot_dimension_numbers<[1], [0], [0], [1], [0, 0, 1, 1], [], []>} : vector<64x640xbf16>, vector<640x128xbf16>, vector<64x128xf32> -> vector<64x128xf32>
    %c0_47 = arith.constant 0 : index
    %c0_48 = arith.constant 0 : index
    %27 = vector.load %arg6[%c0_47, %c0_48] : memref<1x128xf32, #tpu.memory_space<vmem>>, vector<1x128xf32>
    %28 = vector.broadcast %27 : vector<1x128xf32> to vector<64x128xf32>
    %29 = arith.addf %26, %28 : vector<64x128xf32>
    %30 = math.tanh %29 : vector<64x128xf32>
    %c0_49 = arith.constant 0 : index
    %c0_50 = arith.constant 0 : index
    %c0_51 = arith.constant 0 : index
    %31 = vector.load %arg1[%c0_49, %c0_50, %c0_51] : memref<1x24x1xi32, #tpu.memory_space<vmem>>, vector<1x24x1xi32>
    %32 = vector.shape_cast %31 : vector<1x24x1xi32> to vector<24x1xi32>
    %c0_52 = arith.constant 0 : index
    %c0_53 = arith.constant 0 : index
    %c0_54 = arith.constant 0 : index
    %33 = vector.load %arg2[%c0_52, %c0_53, %c0_54] : memref<1x24x1xi32, #tpu.memory_space<vmem>>, vector<1x24x1xi32>
    %34 = vector.shape_cast %33 : vector<1x24x1xi32> to vector<24x1xi32>
    %35 = tpu.iota {dimensions = array<i32: 1>} : vector<24x64xi32>
    %36 = vector.broadcast %32 : vector<24x1xi32> to vector<24x64xi32>
    %37 = arith.cmpi sge, %35, %36 : vector<24x64xi32>
    %38 = vector.broadcast %34 : vector<24x1xi32> to vector<24x64xi32>
    %39 = arith.cmpi slt, %35, %38 : vector<24x64xi32>
    %40 = arith.andi %37, %39 : vector<24x64xi1>
    %41 = arith.extui %40 : vector<24x64xi1> to vector<24x64xi32>
    %42 = arith.sitofp %41 : vector<24x64xi32> to vector<24x64xf32>
    %43 = arith.subi %34, %32 : vector<24x1xi32>
    %44 = arith.sitofp %43 : vector<24x1xi32> to vector<24x1xf32>
    %cst_55 = arith.constant 0.000000e+00 : f32
    %45 = vector.broadcast %cst_55 : f32 to vector<24x1xf32>
    %46 = arith.cmpf ogt, %44, %45 : vector<24x1xf32>
    %47 = tpu.reciprocal %44 {approx = true} : vector<24x1xf32> -> vector<24x1xf32>
    %cst_56 = arith.constant 0.000000e+00 : f32
    %48 = vector.broadcast %cst_56 : f32 to vector<24x1xf32>
    %49 = arith.select %46, %47, %48 : vector<24x1xi1>, vector<24x1xf32>
    %cst_57 = arith.constant dense<0.000000e+00> : vector<24x128xf32>
    %50 = tpu.matmul %42, %30, %cst_57 {dimension_numbers = #tpu.dot_dimension_numbers<[1], [0], [0], [1], [0, 0, 1, 1], [], []>} : vector<24x64xf32>, vector<64x128xf32>, vector<24x128xf32> -> vector<24x128xf32>
    %51 = vector.broadcast %49 : vector<24x1xf32> to vector<24x128xf32>
    %52 = arith.mulf %50, %51 : vector<24x128xf32>
    %c0_58 = arith.constant 0 : index
    %c0_59 = arith.constant 0 : index
    %c0_60 = arith.constant 0 : index
    %53 = vector.load %arg4[%c0_58, %c0_59, %c0_60] : memref<1x4x128xf32, #tpu.memory_space<vmem>>, vector<1x4x128xf32>
    %54 = vector.shape_cast %53 : vector<1x4x128xf32> to vector<4x128xf32>
    %55 = vector.extract_strided_slice %52 {offsets = [0, 0], sizes = [4, 128], strides = [1, 1]} : vector<24x128xf32> to vector<4x128xf32>
    %56 = vector.extract_strided_slice %52 {offsets = [8, 0], sizes = [4, 128], strides = [1, 1]} : vector<24x128xf32> to vector<4x128xf32>
    %57 = vector.extract_strided_slice %52 {offsets = [16, 0], sizes = [4, 128], strides = [1, 1]} : vector<24x128xf32> to vector<4x128xf32>
    %58 = tpu.concatenate %54, %55, %56, %57 in 1 : vector<4x128xf32>, vector<4x128xf32>, vector<4x128xf32>, vector<4x128xf32> -> vector<4x512xf32>
    %c0_61 = arith.constant 0 : index
    %c0_62 = arith.constant 0 : index
    %59 = vector.load %arg7[%c0_61, %c0_62] : memref<512x128xf32, #tpu.memory_space<vmem>>, vector<512x128xf32>
    %cst_63 = arith.constant dense<0.000000e+00> : vector<4x128xf32>
    %60 = tpu.matmul %58, %59, %cst_63 {dimension_numbers = #tpu.dot_dimension_numbers<[1], [0], [0], [1], [0, 0, 1, 1], [], []>} : vector<4x512xf32>, vector<512x128xf32>, vector<4x128xf32> -> vector<4x128xf32>
    %c0_64 = arith.constant 0 : index
    %c0_65 = arith.constant 0 : index
    %61 = vector.load %arg8[%c0_64, %c0_65] : memref<1x128xf32, #tpu.memory_space<vmem>>, vector<1x128xf32>
    %62 = vector.broadcast %61 : vector<1x128xf32> to vector<4x128xf32>
    %63 = arith.addf %60, %62 : vector<4x128xf32>
    %cst_66 = arith.constant dense<0xFF800000> : vector<4xf32>
    %64 = vector.multi_reduction <maximumf>, %63, %cst_66 [1] : vector<4x128xf32> to vector<4xf32>
    %65 = vector.shape_cast %64 : vector<4xf32> to vector<4x1xf32>
    %66 = vector.broadcast %65 : vector<4x1xf32> to vector<4x128xf32>
    %67 = arith.subf %63, %66 : vector<4x128xf32>
    %68 = math.exp %67 : vector<4x128xf32>
    %cst_67 = arith.constant dense<0.000000e+00> : vector<4xf32>
    %69 = vector.multi_reduction <add>, %68, %cst_67 [1] : vector<4x128xf32> to vector<4xf32>
    %70 = vector.shape_cast %69 : vector<4xf32> to vector<4x1xf32>
    %71 = vector.broadcast %70 : vector<4x1xf32> to vector<4x128xf32>
    %72 = arith.divf %68, %71 : vector<4x128xf32>
    %c0_68 = arith.constant 0 : index
    %c0_69 = arith.constant 0 : index
    %c0_70 = arith.constant 0 : index
    %73 = vector.load %arg9[%c0_68, %c0_69, %c0_70] : memref<1x4x128xf32, #tpu.memory_space<vmem>>, vector<1x4x128xf32>
    %74 = vector.shape_cast %73 : vector<1x4x128xf32> to vector<4x128xf32>
    %75 = vector.shape_cast %72 : vector<4x128xf32> to vector<1x4x128xf32>
    tpu.vector_store %arg9[%c0_68, %c0_69, %c0_70], %75 {strides = array<i32>} : memref<1x4x128xf32, #tpu.memory_space<vmem>>, vector<1x4x128xf32>,
    return
  }
  func.func @transform_0(%arg0: i32) -> (i32, i32, i32) {
    %c0_i32 = arith.constant 0 : i32
    %c0_i32_0 = arith.constant 0 : i32
    %c0_i32_1 = arith.constant 0 : i32
    return %arg0, %c0_i32, %c0_i32_0 : i32, i32, i32
  }
  func.func @transform_1(%arg0: i32) -> (i32, i32, i32) {
    %c0_i32 = arith.constant 0 : i32
    %c0_i32_0 = arith.constant 0 : i32
    %c0_i32_1 = arith.constant 0 : i32
    return %arg0, %c0_i32, %c0_i32_0 : i32, i32, i32
  }
  func.func @transform_2(%arg0: i32) -> (i32, i32, i32, i32) {
    %c0_i32 = arith.constant 0 : i32
    %c0_i32_0 = arith.constant 0 : i32
    %c0_i32_1 = arith.constant 0 : i32
    %c0_i32_2 = arith.constant 0 : i32
    return %arg0, %c0_i32, %c0_i32_0, %c0_i32_1 : i32, i32, i32, i32
  }
  func.func @transform_3(%arg0: i32) -> (i32, i32, i32) {
    %c0_i32 = arith.constant 0 : i32
    %c0_i32_0 = arith.constant 0 : i32
    %c0_i32_1 = arith.constant 0 : i32
    return %arg0, %c0_i32, %c0_i32_0 : i32, i32, i32
  }
  func.func @transform_4(%arg0: i32) -> (i32, i32) {
    %c0_i32 = arith.constant 0 : i32
    %c0_i32_0 = arith.constant 0 : i32
    %c0_i32_1 = arith.constant 0 : i32
    return %c0_i32, %c0_i32_0 : i32, i32
  }
  func.func @transform_5(%arg0: i32) -> (i32, i32) {
    %c0_i32 = arith.constant 0 : i32
    %c0_i32_0 = arith.constant 0 : i32
    %c0_i32_1 = arith.constant 0 : i32
    return %c0_i32, %c0_i32_0 : i32, i32
  }
  func.func @transform_6(%arg0: i32) -> (i32, i32) {
    %c0_i32 = arith.constant 0 : i32
    %c0_i32_0 = arith.constant 0 : i32
    %c0_i32_1 = arith.constant 0 : i32
    return %c0_i32, %c0_i32_0 : i32, i32
  }
  func.func @transform_7(%arg0: i32) -> (i32, i32) {
    %c0_i32 = arith.constant 0 : i32
    %c0_i32_0 = arith.constant 0 : i32
    %c0_i32_1 = arith.constant 0 : i32
    return %c0_i32, %c0_i32_0 : i32, i32
  }
  func.func @transform_8(%arg0: i32) -> (i32, i32, i32) {
    %c0_i32 = arith.constant 0 : i32
    %c0_i32_0 = arith.constant 0 : i32
    %c0_i32_1 = arith.constant 0 : i32
    return %arg0, %c0_i32, %c0_i32_0 : i32, i32, i32
  }
}

</mosaic_0001>

<llo_original>
// kernel: cnn_forward.1
$region0: #{cnn_forward.1}
  #allocation0 [shape = 'u32[]', space=smem, size = 0x4, offset = 0x4, fixed_abs, tag = 'smem constant byte address 0x4 - core index']
  #allocation1 [shape = 'u32[144,128]{1,0:T(1,128)}', space=vmem, size = 0x12000, scoped, tag = 'internal scratch']
  #allocation2 [shape = 'bf16[4,16,640]{2,1,0:T(16,128)(2,1)}', space=vmem, size = 0x14000, scoped, tag = 'scratch operand']
  %s0 = inlined_call_operand.vmem [shape: s32[1,24,1], index: 0, kind: input, shape index: {}]
  %s1 = inlined_call_operand.vmem [shape: s32[1,24,1], index: 1, kind: input, shape index: {}]
  %s2 = inlined_call_operand.vmem [shape: bf16[1,4,16,128], index: 2, kind: input, shape index: {}]
  %s3 = inlined_call_operand.vmem [shape: f32[1,4,128], index: 3, kind: input, shape index: {}]
  %s4 = inlined_call_operand.vmem [shape: bf16[640,128], index: 4, kind: input, shape index: {}]
  %s5 = inlined_call_operand.vmem [shape: f32[1,128], index: 5, kind: input, shape index: {}]
  %s6 = inlined_call_operand.vmem [shape: f32[512,128], index: 6, kind: input, shape index: {}]
  %s7 = inlined_call_operand.vmem [shape: f32[1,128], index: 7, kind: input, shape index: {}]
  %s8 = inlined_call_operand.hbm [shape: f32[1,4,128], index: 8, kind: output, shape index: {}]
  %s9 = sld [smem:[#allocation0]]
  $region42: #{cnn_forward.1} parent=0
    _
  %s11 = ssub.s32 1, %s9
  %s12 = scalar_select 0, %s11, %s9
  $region1: #{cnn_forward.1} parent=0
    #allocation3 [shape = 'u8[2048]{0}', space=vmem, size = 0x800, scoped, tag = 'output window, operand 0, single buffered']
    #allocation4 [shape = 's32[1]{0}', space=sflag, size = 0x4, scoped, tag = 'scoped memory for cnn_forward.1']
    %13 = vsyncpa [#allocation4], 0
    // Predicated region
    $region2: #{cnn_forward.1} parent=1 // pred_check
      _
    $region3: #{cnn_forward.1} parent=1 // pred_check_branch
      %15 = sbr.rel (0) target = $region5
    $region4: #{cnn_forward.1} parent=1 // pred_region
      _
    $region5: #{cnn_forward.1} parent=1 // pred_fallthru
      _
    // Predicated region
    $region6: #{cnn_forward.1} parent=1 // pred_check
      _
    $region7: #{cnn_forward.1} parent=1 // pred_check_branch
      %17 = sbr.rel (0) target = $region9
    $region8: #{cnn_forward.1} parent=1 // pred_region
      _
    $region9: #{cnn_forward.1} parent=1 // pred_fallthru
      _
    // Predicated region
    $region10: #{cnn_forward.1} parent=1 // pred_check
      _
    $region11: #{cnn_forward.1} parent=1 // pred_check_branch
      %19 = sbr.rel (0) target = $region13
    $region12: #{cnn_forward.1} parent=1 // pred_region
      _
    $region13: #{cnn_forward.1} parent=1 // pred_fallthru
      _
    // Predicated region
    $region14: #{cnn_forward.1} parent=1 // pred_check
      _
    $region15: #{cnn_forward.1} parent=1 // pred_check_branch
      %21 = sbr.rel (0) target = $region17
    $region16: #{cnn_forward.1} parent=1 // pred_region
      _
    $region17: #{cnn_forward.1} parent=1 // pred_fallthru
      _
    // Predicated region
    $region18: #{cnn_forward.1} parent=1 // pred_check
      _
    $region19: #{cnn_forward.1} parent=1 // pred_check_branch
      %23 = sbr.rel (0) target = $region21
    $region20: #{cnn_forward.1} parent=1 // pred_region
      _
    $region21: #{cnn_forward.1} parent=1 // pred_fallthru
      _
    // Predicated region
    $region22: #{cnn_forward.1} parent=1 // pred_check
      _
    $region23: #{cnn_forward.1} parent=1 // pred_check_branch
      %25 = sbr.rel (0) target = $region25
    $region24: #{cnn_forward.1} parent=1 // pred_region
      _
    $region25: #{cnn_forward.1} parent=1 // pred_fallthru
      _
    // Predicated region
    $region26: #{cnn_forward.1} parent=1 // pred_check
      _
    $region27: #{cnn_forward.1} parent=1 // pred_check_branch
      %27 = sbr.rel (0) target = $region29
    $region28: #{cnn_forward.1} parent=1 // pred_region
      _
    $region29: #{cnn_forward.1} parent=1 // pred_fallthru
      _
    // Predicated region
    $region30: #{cnn_forward.1} parent=1 // pred_check
      _
    $region31: #{cnn_forward.1} parent=1 // pred_check_branch
      %29 = sbr.rel (0) target = $region33
    $region32: #{cnn_forward.1} parent=1 // pred_region
      _
    $region33: #{cnn_forward.1} parent=1 // pred_fallthru
      _
    %31 = vst [vmem:[#allocation2] sm:$0x1] 0
    %32 = vst [vmem:[#allocation2 + $0x28] sm:$0x1] 0
    %33 = vst [vmem:[#allocation2 + $0x50] sm:$0x1] 0
    %34 = vst [vmem:[#allocation2 + $0x78] sm:$0x1] 0
    %v35 = vld [vmem:[%s2] sm:$0xf]
    %v36 = vld [vmem:[%s2 + $0x4] sm:$0x7]
    %v37 = vld [vmem:[%s2 + $0x8] sm:$0xf]
    %v38 = vld [vmem:[%s2 + $0xc] sm:$0x7]
    %v39 = vld [vmem:[%s2 + $0x10] sm:$0xf]
    %v40 = vld [vmem:[%s2 + $0x14] sm:$0x7]
    %v41 = vld [vmem:[%s2 + $0x18] sm:$0xf]
    %v42 = vld [vmem:[%s2 + $0x1c] sm:$0x7]
    %v51 = vunpack.c.l.b16 %v35
    %v52 = vunpack.c.l.b16 %v36
    %v53 = vunpack.c.l.b16 %v37
    %v54 = vunpack.c.l.b16 %v38
    %v55 = vunpack.c.l.b16 %v39
    %v56 = vunpack.c.l.b16 %v40
    %v57 = vunpack.c.l.b16 %v41
    %v58 = vunpack.c.l.b16 %v42
    %v59 = vpack.c.b16 %v52, %v51
    %v60 = vpack.c.b16 %v54, %v53
    %v61 = vpack.c.b16 %v56, %v55
    %v62 = vpack.c.b16 %v58, %v57
    %v63 = vrot.slane %v59, 7
    %v64 = vrot.slane %v60, 7
    %v65 = vrot.slane %v61, 7
    %v66 = vrot.slane %v62, 7
    %71 = vst [vmem:[#allocation2] sm:$0xfe] %v63
    %72 = vst [vmem:[#allocation2 + $0x28] sm:$0xfe] %v64
    %73 = vst [vmem:[#allocation2 + $0x50] sm:$0xfe] %v65
    %74 = vst [vmem:[#allocation2 + $0x78] sm:$0xfe] %v66
    %vm75 = vcmask 1040384
    %vm76 = vsmask.f32 256
    %vm77 = vmand %vm75, %vm76
    %v78 = vld [vmem:[#allocation2 + $0x8] sm:$0x1]
    %v79 = vsel %vm77, 0, %v78
    %80 = vst [vmem:[#allocation2 + $0x8] sm:$0x1] %v79
    %v81 = vld [vmem:[#allocation2 + $0x30] sm:$0x1]
    %v82 = vsel %vm77, 0, %v81
    %83 = vst [vmem:[#allocation2 + $0x30] sm:$0x1] %v82
    %v84 = vld [vmem:[#allocation2 + $0x58] sm:$0x1]
    %v85 = vsel %vm77, 0, %v84
    %86 = vst [vmem:[#allocation2 + $0x58] sm:$0x1] %v85
    %v87 = vld [vmem:[#allocation2 + $0x80] sm:$0x1]
    %v88 = vsel %vm77, 0, %v87
    %89 = vst [vmem:[#allocation2 + $0x80] sm:$0x1] %v88
    %v90 = vld [vmem:[%s2] sm:$0xf]
    %v91 = vld [vmem:[%s2 + $0x4] sm:$0xf]
    %v92 = vld [vmem:[%s2 + $0x8] sm:$0xf]
    %v93 = vld [vmem:[%s2 + $0xc] sm:$0xf]
    %v94 = vld [vmem:[%s2 + $0x10] sm:$0xf]
    %v95 = vld [vmem:[%s2 + $0x14] sm:$0xf]
    %v96 = vld [vmem:[%s2 + $0x18] sm:$0xf]
    %v97 = vld [vmem:[%s2 + $0x1c] sm:$0xf]
    %v106 = vunpack.c.l.b16 %v90
    %v107 = vunpack.c.l.b16 %v91
    %v108 = vunpack.c.l.b16 %v92
    %v109 = vunpack.c.l.b16 %v93
    %v110 = vunpack.c.l.b16 %v94
    %v111 = vunpack.c.l.b16 %v95
    %v112 = vunpack.c.l.b16 %v96
    %v113 = vunpack.c.l.b16 %v97
    %v114 = vpack.c.b16 %v107, %v106
    %v115 = vpack.c.b16 %v109, %v108
    %v116 = vpack.c.b16 %v111, %v110
    %v117 = vpack.c.b16 %v113, %v112
    %v119 = vshrl.u32 %v114, 16
    %v121 = vrot.slane %v119, 7
    %v122 = vshll.u32 %v114, 16
    %v124 = vor.u32 %v121, %v122
    %v126 = vshrl.u32 %v115, 16
    %v128 = vrot.slane %v126, 7
    %v129 = vshll.u32 %v115, 16
    %v131 = vor.u32 %v128, %v129
    %v133 = vshrl.u32 %v116, 16
    %v135 = vrot.slane %v133, 7
    %v136 = vshll.u32 %v116, 16
    %v138 = vor.u32 %v135, %v136
    %v140 = vshrl.u32 %v117, 16
    %v142 = vrot.slane %v140, 7
    %v143 = vshll.u32 %v117, 16
    %v145 = vor.u32 %v142, %v143
    %vm150 = vcmask 1047552
    %vm151 = vsmask.f32 7938
    %vm152 = vmand %vm150, %vm151
    %v153 = vld [vmem:[#allocation2 + $0x8] sm:$0xff]
    %v154 = vsel %vm152, %v124, %v153
    %155 = vst [vmem:[#allocation2 + $0x8] sm:$0xff] %v154
    %v156 = vld [vmem:[#allocation2 + $0x30] sm:$0xff]
    %v157 = vsel %vm152, %v131, %v156
    %158 = vst [vmem:[#allocation2 + $0x30] sm:$0xff] %v157
    %v159 = vld [vmem:[#allocation2 + $0x58] sm:$0xff]
    %v160 = vsel %vm152, %v138, %v159
    %161 = vst [vmem:[#allocation2 + $0x58] sm:$0xff] %v160
    %v162 = vld [vmem:[#allocation2 + $0x80] sm:$0xff]
    %v163 = vsel %vm152, %v145, %v162
    %164 = vst [vmem:[#allocation2 + $0x80] sm:$0xff] %v163
    %v165 = vld [vmem:[%s2] sm:$0xf]
    %v166 = vld [vmem:[%s2 + $0x4] sm:$0xf]
    %v167 = vld [vmem:[%s2 + $0x8] sm:$0xf]
    %v168 = vld [vmem:[%s2 + $0xc] sm:$0xf]
    %v169 = vld [vmem:[%s2 + $0x10] sm:$0xf]
    %v170 = vld [vmem:[%s2 + $0x14] sm:$0xf]
    %v171 = vld [vmem:[%s2 + $0x18] sm:$0xf]
    %v172 = vld [vmem:[%s2 + $0x1c] sm:$0xf]
    %v181 = vunpack.c.l.b16 %v165
    %v182 = vunpack.c.l.b16 %v166
    %v183 = vunpack.c.l.b16 %v167
    %v184 = vunpack.c.l.b16 %v168
    %v185 = vunpack.c.l.b16 %v169
    %v186 = vunpack.c.l.b16 %v170
    %v187 = vunpack.c.l.b16 %v171
    %v188 = vunpack.c.l.b16 %v172
    %v189 = vpack.c.b16 %v182, %v181
    %v190 = vpack.c.b16 %v184, %v183
    %v191 = vpack.c.b16 %v186, %v185
    %v192 = vpack.c.b16 %v188, %v187
    %197 = vst [vmem:[#allocation2 + $0x10] sm:$0xff] %v189
    %198 = vst [vmem:[#allocation2 + $0x38] sm:$0xff] %v190
    %199 = vst [vmem:[#allocation2 + $0x60] sm:$0xff] %v191
    %200 = vst [vmem:[#allocation2 + $0x88] sm:$0xff] %v192
    %vm201 = vcmask 1047559
    %vm202 = vsmask.f32 7966
    %vm203 = vmand %vm201, %vm202
    %v204 = vld [vmem:[#allocation2 + $0x18] sm:$0x80]
    %v205 = vsel %vm203, 0, %v204
    %206 = vst [vmem:[#allocation2 + $0x18] sm:$0x80] %v205
    %v207 = vld [vmem:[#allocation2 + $0x40] sm:$0x80]
    %v208 = vsel %vm203, 0, %v207
    %209 = vst [vmem:[#allocation2 + $0x40] sm:$0x80] %v208
    %v210 = vld [vmem:[#allocation2 + $0x68] sm:$0x80]
    %v211 = vsel %vm203, 0, %v210
    %212 = vst [vmem:[#allocation2 + $0x68] sm:$0x80] %v211
    %v213 = vld [vmem:[#allocation2 + $0x90] sm:$0x80]
    %v214 = vsel %vm203, 0, %v213
    %215 = vst [vmem:[#allocation2 + $0x90] sm:$0x80] %v214
    %v216 = vld [vmem:[%s2] sm:$0xf]
    %v217 = vld [vmem:[%s2 + $0x4] sm:$0xf]
    %v218 = vld [vmem:[%s2 + $0x8] sm:$0xf]
    %v219 = vld [vmem:[%s2 + $0xc] sm:$0xf]
    %v220 = vld [vmem:[%s2 + $0x10] sm:$0xf]
    %v221 = vld [vmem:[%s2 + $0x14] sm:$0xf]
    %v222 = vld [vmem:[%s2 + $0x18] sm:$0xf]
    %v223 = vld [vmem:[%s2 + $0x1c] sm:$0xf]
    %v232 = vunpack.c.l.b16 %v216
    %v233 = vunpack.c.l.b16 %v217
    %v234 = vunpack.c.l.b16 %v218
    %v235 = vunpack.c.l.b16 %v219
    %v236 = vunpack.c.l.b16 %v220
    %v237 = vunpack.c.l.b16 %v221
    %v238 = vunpack.c.l.b16 %v222
    %v239 = vunpack.c.l.b16 %v223
    %v240 = vpack.c.b16 %v233, %v232
    %v241 = vpack.c.b16 %v235, %v234
    %v242 = vpack.c.b16 %v237, %v236
    %v243 = vpack.c.b16 %v239, %v238
    %v245 = vshrl.u32 %v240, 16
    %v247 = vshll.u32 %v240, 16
    %v249 = vrot.slane %v247, 1
    %v250 = vor.u32 %v245, %v249
    %v252 = vshrl.u32 %v241, 16
    %v254 = vshll.u32 %v241, 16
    %v256 = vrot.slane %v254, 1
    %v257 = vor.u32 %v252, %v256
    %v259 = vshrl.u32 %v242, 16
    %v261 = vshll.u32 %v242, 16
    %v263 = vrot.slane %v261, 1
    %v264 = vor.u32 %v259, %v263
    %v266 = vshrl.u32 %v243, 16
    %v268 = vshll.u32 %v243, 16
    %v270 = vrot.slane %v268, 1
    %v271 = vor.u32 %v266, %v270
    %vm276 = vsmask.f32 7424
    %vm277 = vmand %vm150, %vm276
    %v278 = vld [vmem:[#allocation2 + $0x18] sm:$0xff]
    %v279 = vsel %vm277, %v250, %v278
    %280 = vst [vmem:[#allocation2 + $0x18] sm:$0xff] %v279
    %v281 = vld [vmem:[#allocation2 + $0x40] sm:$0xff]
    %v282 = vsel %vm277, %v257, %v281
    %283 = vst [vmem:[#allocation2 + $0x40] sm:$0xff] %v282
    %v284 = vld [vmem:[#allocation2 + $0x68] sm:$0xff]
    %v285 = vsel %vm277, %v264, %v284
    %286 = vst [vmem:[#allocation2 + $0x68] sm:$0xff] %v285
    %v287 = vld [vmem:[#allocation2 + $0x90] sm:$0xff]
    %v288 = vsel %vm277, %v271, %v287
    %289 = vst [vmem:[#allocation2 + $0x90] sm:$0xff] %v288
    %290 = vst [vmem:[#allocation2 + $0x20] sm:$0x80] 0
    %291 = vst [vmem:[#allocation2 + $0x48] sm:$0x80] 0
    %292 = vst [vmem:[#allocation2 + $0x70] sm:$0x80] 0
    %293 = vst [vmem:[#allocation2 + $0x98] sm:$0x80] 0
    %v294 = vld [vmem:[%s2] sm:$0xe]
    %v295 = vld [vmem:[%s2 + $0x4] sm:$0xf]
    %v296 = vld [vmem:[%s2 + $0x8] sm:$0xe]
    %v297 = vld [vmem:[%s2 + $0xc] sm:$0xf]
    %v298 = vld [vmem:[%s2 + $0x10] sm:$0xe]
    %v299 = vld [vmem:[%s2 + $0x14] sm:$0xf]
    %v300 = vld [vmem:[%s2 + $0x18] sm:$0xe]
    %v301 = vld [vmem:[%s2 + $0x1c] sm:$0xf]
    %v310 = vunpack.c.l.b16 %v294
    %v311 = vunpack.c.l.b16 %v295
    %v312 = vunpack.c.l.b16 %v296
    %v313 = vunpack.c.l.b16 %v297
    %v314 = vunpack.c.l.b16 %v298
    %v315 = vunpack.c.l.b16 %v299
    %v316 = vunpack.c.l.b16 %v300
    %v317 = vunpack.c.l.b16 %v301
    %v318 = vpack.c.b16 %v311, %v310
    %v319 = vpack.c.b16 %v313, %v312
    %v320 = vpack.c.b16 %v315, %v314
    %v321 = vpack.c.b16 %v317, %v316
    %v322 = vrot.slane %v318, 1
    %v323 = vrot.slane %v319, 1
    %v324 = vrot.slane %v320, 1
    %v325 = vrot.slane %v321, 1
    %330 = vst [vmem:[#allocation2 + $0x20] sm:$0x7f] %v322
    %331 = vst [vmem:[#allocation2 + $0x48] sm:$0x7f] %v323
    %332 = vst [vmem:[#allocation2 + $0x70] sm:$0x7f] %v324
    %333 = vst [vmem:[#allocation2 + $0x98] sm:$0x7f] %v325
    %v334 = vld [vmem:[#allocation2] sm:$0xff]
    %v335 = vld [vmem:[#allocation2 + $0x8] sm:$0xff]
    %v336 = vld [vmem:[#allocation2 + $0x10] sm:$0xff]
    %v337 = vld [vmem:[#allocation2 + $0x18] sm:$0xff]
    %v338 = vld [vmem:[#allocation2 + $0x20] sm:$0xff]
    %v339 = vld [vmem:[#allocation2 + $0x28] sm:$0xff]
    %v340 = vld [vmem:[#allocation2 + $0x30] sm:$0xff]
    %v341 = vld [vmem:[#allocation2 + $0x38] sm:$0xff]
    %v342 = vld [vmem:[#allocation2 + $0x40] sm:$0xff]
    %v343 = vld [vmem:[#allocation2 + $0x48] sm:$0xff]
    %v344 = vld [vmem:[#allocation2 + $0x50] sm:$0xff]
    %v345 = vld [vmem:[#allocation2 + $0x58] sm:$0xff]
    %v346 = vld [vmem:[#allocation2 + $0x60] sm:$0xff]
    %v347 = vld [vmem:[#allocation2 + $0x68] sm:$0xff]
    %v348 = vld [vmem:[#allocation2 + $0x70] sm:$0xff]
    %v349 = vld [vmem:[#allocation2 + $0x78] sm:$0xff]
    %v350 = vld [vmem:[#allocation2 + $0x80] sm:$0xff]
    %v351 = vld [vmem:[#allocation2 + $0x88] sm:$0xff]
    %v352 = vld [vmem:[#allocation2 + $0x90] sm:$0xff]
    %v353 = vld [vmem:[#allocation2 + $0x98] sm:$0xff]
    %v354 = vld [vmem:[%s4] sm:$0xf]
    %v355 = vld [vmem:[%s4 + $0x4] sm:$0xf]
    %v356 = vld [vmem:[%s4 + $0x8] sm:$0xf]
    %v357 = vld [vmem:[%s4 + $0xc] sm:$0xf]
    %v358 = vld [vmem:[%s4 + $0x10] sm:$0xf]
    %v359 = vld [vmem:[%s4 + $0x14] sm:$0xf]
    %v360 = vld [vmem:[%s4 + $0x18] sm:$0xf]
    %v361 = vld [vmem:[%s4 + $0x1c] sm:$0xf]
    %v362 = vld [vmem:[%s4 + $0x20] sm:$0xf]
    %v363 = vld [vmem:[%s4 + $0x24] sm:$0xf]
    %v364 = vld [vmem:[%s4 + $0x28] sm:$0xf]
    %v365 = vld [vmem:[%s4 + $0x2c] sm:$0xf]
    %v366 = vld [vmem:[%s4 + $0x30] sm:$0xf]
    %v367 = vld [vmem:[%s4 + $0x34] sm:$0xf]
    %v368 = vld [vmem:[%s4 + $0x38] sm:$0xf]
    %v369 = vld [vmem:[%s4 + $0x3c] sm:$0xf]
    %v370 = vld [vmem:[%s4 + $0x40] sm:$0xf]
    %v371 = vld [vmem:[%s4 + $0x44] sm:$0xf]
    %v372 = vld [vmem:[%s4 + $0x48] sm:$0xf]
    %v373 = vld [vmem:[%s4 + $0x4c] sm:$0xf]
    %v374 = vld [vmem:[%s4 + $0x50] sm:$0xf]
    %v375 = vld [vmem:[%s4 + $0x54] sm:$0xf]
    %v376 = vld [vmem:[%s4 + $0x58] sm:$0xf]
    %v377 = vld [vmem:[%s4 + $0x5c] sm:$0xf]
    %v378 = vld [vmem:[%s4 + $0x60] sm:$0xf]
    %v379 = vld [vmem:[%s4 + $0x64] sm:$0xf]
    %v380 = vld [vmem:[%s4 + $0x68] sm:$0xf]
    %v381 = vld [vmem:[%s4 + $0x6c] sm:$0xf]
    %v382 = vld [vmem:[%s4 + $0x70] sm:$0xf]
    %v383 = vld [vmem:[%s4 + $0x74] sm:$0xf]
    %v384 = vld [vmem:[%s4 + $0x78] sm:$0xf]
    %v385 = vld [vmem:[%s4 + $0x7c] sm:$0xf]
    %v386 = vld [vmem:[%s4 + $0x80] sm:$0xf]
    %v387 = vld [vmem:[%s4 + $0x84] sm:$0xf]
    %v388 = vld [vmem:[%s4 + $0x88] sm:$0xf]
    %v389 = vld [vmem:[%s4 + $0x8c] sm:$0xf]
    %v390 = vld [vmem:[%s4 + $0x90] sm:$0xf]
    %v391 = vld [vmem:[%s4 + $0x94] sm:$0xf]
    %v392 = vld [vmem:[%s4 + $0x98] sm:$0xf]
    %v393 = vld [vmem:[%s4 + $0x9c] sm:$0xf]
    %v394 = vld [vmem:[%s4 + $0xa0] sm:$0xf]
    %v395 = vld [vmem:[%s4 + $0xa4] sm:$0xf]
    %v396 = vld [vmem:[%s4 + $0xa8] sm:$0xf]
    %v397 = vld [vmem:[%s4 + $0xac] sm:$0xf]
    %v398 = vld [vmem:[%s4 + $0xb0] sm:$0xf]
    %v399 = vld [vmem:[%s4 + $0xb4] sm:$0xf]
    %v400 = vld [vmem:[%s4 + $0xb8] sm:$0xf]
    %v401 = vld [vmem:[%s4 + $0xbc] sm:$0xf]
    %v402 = vld [vmem:[%s4 + $0xc0] sm:$0xf]
    %v403 = vld [vmem:[%s4 + $0xc4] sm:$0xf]
    %v404 = vld [vmem:[%s4 + $0xc8] sm:$0xf]
    %v405 = vld [vmem:[%s4 + $0xcc] sm:$0xf]
    %v406 = vld [vmem:[%s4 + $0xd0] sm:$0xf]
    %v407 = vld [vmem:[%s4 + $0xd4] sm:$0xf]
    %v408 = vld [vmem:[%s4 + $0xd8] sm:$0xf]
    %v409 = vld [vmem:[%s4 + $0xdc] sm:$0xf]
    %v410 = vld [vmem:[%s4 + $0xe0] sm:$0xf]
    %v411 = vld [vmem:[%s4 + $0xe4] sm:$0xf]
    %v412 = vld [vmem:[%s4 + $0xe8] sm:$0xf]
    %v413 = vld [vmem:[%s4 + $0xec] sm:$0xf]
    %v414 = vld [vmem:[%s4 + $0xf0] sm:$0xf]
    %v415 = vld [vmem:[%s4 + $0xf4] sm:$0xf]
    %v416 = vld [vmem:[%s4 + $0xf8] sm:$0xf]
    %v417 = vld [vmem:[%s4 + $0xfc] sm:$0xf]
    %v418 = vld [vmem:[%s4 + $0x100] sm:$0xf]
    %v419 = vld [vmem:[%s4 + $0x104] sm:$0xf]
    %v420 = vld [vmem:[%s4 + $0x108] sm:$0xf]
    %v421 = vld [vmem:[%s4 + $0x10c] sm:$0xf]
    %v422 = vld [vmem:[%s4 + $0x110] sm:$0xf]
    %v423 = vld [vmem:[%s4 + $0x114] sm:$0xf]
    %v424 = vld [vmem:[%s4 + $0x118] sm:$0xf]
    %v425 = vld [vmem:[%s4 + $0x11c] sm:$0xf]
    %v426 = vld [vmem:[%s4 + $0x120] sm:$0xf]
    %v427 = vld [vmem:[%s4 + $0x124] sm:$0xf]
    %v428 = vld [vmem:[%s4 + $0x128] sm:$0xf]
    %v429 = vld [vmem:[%s4 + $0x12c] sm:$0xf]
    %v430 = vld [vmem:[%s4 + $0x130] sm:$0xf]
    %v431 = vld [vmem:[%s4 + $0x134] sm:$0xf]
    %v432 = vld [vmem:[%s4 + $0x138] sm:$0xf]
    %v433 = vld [vmem:[%s4 + $0x13c] sm:$0xf]
    %v434 = vld [vmem:[%s5] sm:$0x1]
    %v436 = vlaneseq
    %v437 = vshrl.u32 %v436, 7
    %v438 = vsub.s32 0, %v437
    %v439 = vrot.slane %v434, %v438
    %v521 = vunpack.c.l.b16 %v354
    %v522 = vunpack.c.l.b16 %v355
    %v523 = vunpack.c.l.b16 %v356
    %v524 = vunpack.c.l.b16 %v357
    %v525 = vunpack.c.l.b16 %v358
    %v526 = vunpack.c.l.b16 %v359
    %v527 = vunpack.c.l.b16 %v360
    %v528 = vunpack.c.l.b16 %v361
    %v529 = vunpack.c.l.b16 %v362
    %v530 = vunpack.c.l.b16 %v363
    %v531 = vunpack.c.l.b16 %v364
    %v532 = vunpack.c.l.b16 %v365
    %v533 = vunpack.c.l.b16 %v366
    %v534 = vunpack.c.l.b16 %v367
    %v535 = vunpack.c.l.b16 %v368
    %v536 = vunpack.c.l.b16 %v369
    %v537 = vunpack.c.l.b16 %v370
    %v538 = vunpack.c.l.b16 %v371
    %v539 = vunpack.c.l.b16 %v372
    %v540 = vunpack.c.l.b16 %v373
    %v541 = vunpack.c.l.b16 %v374
    %v542 = vunpack.c.l.b16 %v375
    %v543 = vunpack.c.l.b16 %v376
    %v544 = vunpack.c.l.b16 %v377
    %v545 = vunpack.c.l.b16 %v378
    %v546 = vunpack.c.l.b16 %v379
    %v547 = vunpack.c.l.b16 %v380
    %v548 = vunpack.c.l.b16 %v381
    %v549 = vunpack.c.l.b16 %v382
    %v550 = vunpack.c.l.b16 %v383
    %v551 = vunpack.c.l.b16 %v384
    %v552 = vunpack.c.l.b16 %v385
    %v553 = vunpack.c.l.b16 %v386
    %v554 = vunpack.c.l.b16 %v387
    %v555 = vunpack.c.l.b16 %v388
    %v556 = vunpack.c.l.b16 %v389
    %v557 = vunpack.c.l.b16 %v390
    %v558 = vunpack.c.l.b16 %v391
    %v559 = vunpack.c.l.b16 %v392
    %v560 = vunpack.c.l.b16 %v393
    %v561 = vunpack.c.l.b16 %v394
    %v562 = vunpack.c.l.b16 %v395
    %v563 = vunpack.c.l.b16 %v396
    %v564 = vunpack.c.l.b16 %v397
    %v565 = vunpack.c.l.b16 %v398
    %v566 = vunpack.c.l.b16 %v399
    %v567 = vunpack.c.l.b16 %v400
    %v568 = vunpack.c.l.b16 %v401
    %v569 = vunpack.c.l.b16 %v402
    %v570 = vunpack.c.l.b16 %v403
    %v571 = vunpack.c.l.b16 %v404
    %v572 = vunpack.c.l.b16 %v405
    %v573 = vunpack.c.l.b16 %v406
    %v574 = vunpack.c.l.b16 %v407
    %v575 = vunpack.c.l.b16 %v408
    %v576 = vunpack.c.l.b16 %v409
    %v577 = vunpack.c.l.b16 %v410
    %v578 = vunpack.c.l.b16 %v411
    %v579 = vunpack.c.l.b16 %v412
    %v580 = vunpack.c.l.b16 %v413
    %v581 = vunpack.c.l.b16 %v414
    %v582 = vunpack.c.l.b16 %v415
    %v583 = vunpack.c.l.b16 %v416
    %v584 = vunpack.c.l.b16 %v417
    %v585 = vunpack.c.l.b16 %v418
    %v586 = vunpack.c.l.b16 %v419
    %v587 = vunpack.c.l.b16 %v420
    %v588 = vunpack.c.l.b16 %v421
    %v589 = vunpack.c.l.b16 %v422
    %v590 = vunpack.c.l.b16 %v423
    %v591 = vunpack.c.l.b16 %v424
    %v592 = vunpack.c.l.b16 %v425
    %v593 = vunpack.c.l.b16 %v426
    %v594 = vunpack.c.l.b16 %v427
    %v595 = vunpack.c.l.b16 %v428
    %v596 = vunpack.c.l.b16 %v429
    %v597 = vunpack.c.l.b16 %v430
    %v598 = vunpack.c.l.b16 %v431
    %v599 = vunpack.c.l.b16 %v432
    %v600 = vunpack.c.l.b16 %v433
    %v601 = vpack.c.b16 %v522, %v521
    %v602 = vpack.c.b16 %v524, %v523
    %v603 = vpack.c.b16 %v526, %v525
    %v604 = vpack.c.b16 %v528, %v527
    %v605 = vpack.c.b16 %v530, %v529
    %v606 = vpack.c.b16 %v532, %v531
    %v607 = vpack.c.b16 %v534, %v533
    %v608 = vpack.c.b16 %v536, %v535
    %v609 = vpack.c.b16 %v538, %v537
    %v610 = vpack.c.b16 %v540, %v539
    %v611 = vpack.c.b16 %v542, %v541
    %v612 = vpack.c.b16 %v544, %v543
    %v613 = vpack.c.b16 %v546, %v545
    %v614 = vpack.c.b16 %v548, %v547
    %v615 = vpack.c.b16 %v550, %v549
    %v616 = vpack.c.b16 %v552, %v551
    %v617 = vpack.c.b16 %v554, %v553
    %v618 = vpack.c.b16 %v556, %v555
    %v619 = vpack.c.b16 %v558, %v557
    %v620 = vpack.c.b16 %v560, %v559
    %v621 = vpack.c.b16 %v562, %v561
    %v622 = vpack.c.b16 %v564, %v563
    %v623 = vpack.c.b16 %v566, %v565
    %v624 = vpack.c.b16 %v568, %v567
    %v625 = vpack.c.b16 %v570, %v569
    %v626 = vpack.c.b16 %v572, %v571
    %v627 = vpack.c.b16 %v574, %v573
    %v628 = vpack.c.b16 %v576, %v575
    %v629 = vpack.c.b16 %v578, %v577
    %v630 = vpack.c.b16 %v580, %v579
    %v631 = vpack.c.b16 %v582, %v581
    %v632 = vpack.c.b16 %v584, %v583
    %v633 = vpack.c.b16 %v586, %v585
    %v634 = vpack.c.b16 %v588, %v587
    %v635 = vpack.c.b16 %v590, %v589
    %v636 = vpack.c.b16 %v592, %v591
    %v637 = vpack.c.b16 %v594, %v593
    %v638 = vpack.c.b16 %v596, %v595
    %v639 = vpack.c.b16 %v598, %v597
    %v640 = vpack.c.b16 %v600, %v599
    %681 = vmatprep.subr.bf16.mxu0 0
    %682 = vmatpush1.bf16.msra.mxu0 %v601
    %683 = vmatprep.subr.bf16.mxu0 0
    %684 = vmatpush1.bf16.msra.mxu0 %v602
    %685 = vmatprep.subr.bf16.mxu0 0
    %686 = vmatpush1.bf16.msra.mxu0 %v603
    %687 = vmatprep.subr.bf16.mxu0 0
    %688 = vmatpush1.bf16.msra.mxu0 %v604
    %689 = vmatprep.subr.bf16.mxu0 0
    %690 = vmatpush1.bf16.msra.mxu0 %v605
    %691 = vmatprep.subr.bf16.mxu0 0
    %692 = vmatpush1.bf16.msra.mxu0 %v606
    %693 = vmatprep.subr.bf16.mxu0 0
    %694 = vmatpush1.bf16.msra.mxu0 %v607
    %695 = vmatprep.subr.bf16.mxu0 0
    %696 = vmatpush1.bf16.msra.mxu0 %v608
    %697 = vmatprep.subr.bf16.mxu0 0
    %698 = vmatpush1.bf16.msra.mxu0 %v609
    %699 = vmatprep.subr.bf16.mxu0 0
    %700 = vmatpush1.bf16.msra.mxu0 %v610
    %701 = vmatprep.subr.bf16.mxu0 0
    %702 = vmatpush1.bf16.msra.mxu0 %v611
    %703 = vmatprep.subr.bf16.mxu0 0
    %704 = vmatpush1.bf16.msra.mxu0 %v612
    %705 = vmatprep.subr.bf16.mxu0 0
    %706 = vmatpush1.bf16.msra.mxu0 %v613
    %707 = vmatprep.subr.bf16.mxu0 0
    %708 = vmatpush1.bf16.msra.mxu0 %v614
    %709 = vmatprep.subr.bf16.mxu0 0
    %710 = vmatpush1.bf16.msra.mxu0 %v615
    %711 = vmatprep.subr.bf16.mxu0 0
    %712 = vmatpush1.bf16.msra.mxu0 %v616
    %713 = vmatprep.mubr.bf16.mxu0 %v335
    %714 = vmatmul.mubr.bf16.gmra.mrb[0].mxu0 %v334
    %v715 = vpop.f32.mrb[0].mxu0
    %v716 = vadd.f32 %v439, %v715
    %v717 = vpop.f32.mrb[0].mxu0
    %v718 = vpop.f32.mrb[0].mxu0
    %v719 = vadd.f32 %v439, %v718
    %v720 = vpop.f32.mrb[0].mxu0
    %721 = vmatprep.mubr.bf16.mxu0 %v340
    %722 = vmatmul.mubr.bf16.gmra.mrb[0].mxu0 %v339
    %v723 = vpop.f32.mrb[0].mxu0
    %v724 = vadd.f32 %v439, %v723
    %v725 = vpop.f32.mrb[0].mxu0
    %v726 = vpop.f32.mrb[0].mxu0
    %v727 = vadd.f32 %v439, %v726
    %v728 = vpop.f32.mrb[0].mxu0
    %729 = vmatprep.mubr.bf16.mxu0 %v345
    %730 = vmatmul.mubr.bf16.gmra.mrb[0].mxu0 %v344
    %v731 = vpop.f32.mrb[0].mxu0
    %v732 = vadd.f32 %v439, %v731
    %v733 = vpop.f32.mrb[0].mxu0
    %v734 = vpop.f32.mrb[0].mxu0
    %v735 = vadd.f32 %v439, %v734
    %v736 = vpop.f32.mrb[0].mxu0
    %737 = vmatprep.mubr.bf16.mxu0 %v350
    %738 = vmatmul.mubr.bf16.gmra.mrb[0].mxu0 %v349
    %v739 = vpop.f32.mrb[0].mxu0
    %v740 = vadd.f32 %v439, %v739
    %v741 = vpop.f32.mrb[0].mxu0
    %v742 = vpop.f32.mrb[0].mxu0
    %v743 = vadd.f32 %v439, %v742
    %v744 = vpop.f32.mrb[0].mxu0
    %745 = vdwg.mxu0
    %746 = vmatprep.subr.bf16.mxu0 0
    %747 = vmatpush1.bf16.msra.mxu0 %v617
    %748 = vmatprep.subr.bf16.mxu0 0
    %749 = vmatpush1.bf16.msra.mxu0 %v618
    %750 = vmatprep.subr.bf16.mxu0 0
    %751 = vmatpush1.bf16.msra.mxu0 %v619
    %752 = vmatprep.subr.bf16.mxu0 0
    %753 = vmatpush1.bf16.msra.mxu0 %v620
    %754 = vmatprep.subr.bf16.mxu0 0
    %755 = vmatpush1.bf16.msra.mxu0 %v621
    %756 = vmatprep.subr.bf16.mxu0 0
    %757 = vmatpush1.bf16.msra.mxu0 %v622
    %758 = vmatprep.subr.bf16.mxu0 0
    %759 = vmatpush1.bf16.msra.mxu0 %v623
    %760 = vmatprep.subr.bf16.mxu0 0
    %761 = vmatpush1.bf16.msra.mxu0 %v624
    %762 = vmatprep.subr.bf16.mxu0 0
    %763 = vmatpush1.bf16.msra.mxu0 %v625
    %764 = vmatprep.subr.bf16.mxu0 0
    %765 = vmatpush1.bf16.msra.mxu0 %v626
    %766 = vmatprep.subr.bf16.mxu0 0
    %767 = vmatpush1.bf16.msra.mxu0 %v627
    %768 = vmatprep.subr.bf16.mxu0 0
    %769 = vmatpush1.bf16.msra.mxu0 %v628
    %770 = vmatprep.subr.bf16.mxu0 0
    %771 = vmatpush1.bf16.msra.mxu0 %v629
    %772 = vmatprep.subr.bf16.mxu0 0
    %773 = vmatpush1.bf16.msra.mxu0 %v630
    %774 = vmatprep.subr.bf16.mxu0 0
    %775 = vmatpush1.bf16.msra.mxu0 %v631
    %776 = vmatprep.subr.bf16.mxu0 0
    %777 = vmatpush1.bf16.msra.mxu0 %v632
    %778 = vmatprep.mubr.bf16.mxu0 %v337
    %779 = vmatmul.mubr.bf16.gmra.mrb[0].mxu0 %v336
    %v780 = vpop.f32.mrb[0].mxu0
    %v781 = vadd.f32 %v716, %v780
    %v782 = vpop.f32.mrb[0].mxu0
    %v783 = vpop.f32.mrb[0].mxu0
    %v784 = vadd.f32 %v719, %v783
    %v785 = vpop.f32.mrb[0].mxu0
    %786 = vmatprep.mubr.bf16.mxu0 %v342
    %787 = vmatmul.mubr.bf16.gmra.mrb[0].mxu0 %v341
    %v788 = vpop.f32.mrb[0].mxu0
    %v789 = vadd.f32 %v724, %v788
    %v790 = vpop.f32.mrb[0].mxu0
    %v791 = vpop.f32.mrb[0].mxu0
    %v792 = vadd.f32 %v727, %v791
    %v793 = vpop.f32.mrb[0].mxu0
    %794 = vmatprep.mubr.bf16.mxu0 %v347
    %795 = vmatmul.mubr.bf16.gmra.mrb[0].mxu0 %v346
    %v796 = vpop.f32.mrb[0].mxu0
    %v797 = vadd.f32 %v732, %v796
    %v798 = vpop.f32.mrb[0].mxu0
    %v799 = vpop.f32.mrb[0].mxu0
    %v800 = vadd.f32 %v735, %v799
    %v801 = vpop.f32.mrb[0].mxu0
    %802 = vmatprep.mubr.bf16.mxu0 %v352
    %803 = vmatmul.mubr.bf16.gmra.mrb[0].mxu0 %v351
    %v804 = vpop.f32.mrb[0].mxu0
    %v805 = vadd.f32 %v740, %v804
    %v806 = vpop.f32.mrb[0].mxu0
    %v807 = vpop.f32.mrb[0].mxu0
    %v808 = vadd.f32 %v743, %v807
    %v809 = vpop.f32.mrb[0].mxu0
    %810 = vdwg.mxu0
    %811 = vmatprep.subr.bf16.mxu0 0
    %812 = vmatpush1.bf16.msra.mxu0 %v633
    %813 = vmatprep.subr.bf16.mxu0 0
    %814 = vmatpush1.bf16.msra.mxu0 %v634
    %815 = vmatprep.subr.bf16.mxu0 0
    %816 = vmatpush1.bf16.msra.mxu0 %v635
    %817 = vmatprep.subr.bf16.mxu0 0
    %818 = vmatpush1.bf16.msra.mxu0 %v636
    %819 = vmatprep.subr.bf16.mxu0 0
    %820 = vmatpush1.bf16.msra.mxu0 %v637
    %821 = vmatprep.subr.bf16.mxu0 0
    %822 = vmatpush1.bf16.msra.mxu0 %v638
    %823 = vmatprep.subr.bf16.mxu0 0
    %824 = vmatpush1.bf16.msra.mxu0 %v639
    %825 = vmatprep.subr.bf16.mxu0 0
    %826 = vmatpush1.bf16.msra.mxu0 %v640
    %827 = vmatprep.subr.bf16.mxu0 0
    %828 = vmatpush1.bf16.msra.mxu0 0
    %829 = vmatprep.subr.bf16.mxu0 0
    %830 = vmatpush1.bf16.msra.mxu0 0
    %831 = vmatprep.subr.bf16.mxu0 0
    %832 = vmatpush1.bf16.msra.mxu0 0
    %833 = vmatprep.subr.bf16.mxu0 0
    %834 = vmatpush1.bf16.msra.mxu0 0
    %835 = vmatprep.subr.bf16.mxu0 0
    %836 = vmatpush1.bf16.msra.mxu0 0
    %837 = vmatprep.subr.bf16.mxu0 0
    %838 = vmatpush1.bf16.msra.mxu0 0
    %839 = vmatprep.subr.bf16.mxu0 0
    %840 = vmatpush1.bf16.msra.mxu0 0
    %841 = vmatprep.subr.bf16.mxu0 0
    %842 = vmatpush1.bf16.msra.mxu0 0
    %843 = vmatprep.mubr.bf16.mxu0 0
    %844 = vmatmul.mubr.bf16.gmra.mrb[0].mxu0 %v338
    %v845 = vpop.f32.mrb[0].mxu0
    %v846 = vadd.f32 %v781, %v845
    %v847 = vpop.f32.mrb[0].mxu0
    %v848 = vpop.f32.mrb[0].mxu0
    %v849 = vadd.f32 %v784, %v848
    %v850 = vpop.f32.mrb[0].mxu0
    %851 = vmatprep.mubr.bf16.mxu0 0
    %852 = vmatmul.mubr.bf16.gmra.mrb[0].mxu0 %v343
    %v853 = vpop.f32.mrb[0].mxu0
    %v854 = vadd.f32 %v789, %v853
    %v855 = vpop.f32.mrb[0].mxu0
    %v856 = vpop.f32.mrb[0].mxu0
    %v857 = vadd.f32 %v792, %v856
    %v858 = vpop.f32.mrb[0].mxu0
    %859 = vmatprep.mubr.bf16.mxu0 0
    %860 = vmatmul.mubr.bf16.gmra.mrb[0].mxu0 %v348
    %v861 = vpop.f32.mrb[0].mxu0
    %v862 = vadd.f32 %v797, %v861
    %v863 = vpop.f32.mrb[0].mxu0
    %v864 = vpop.f32.mrb[0].mxu0
    %v865 = vadd.f32 %v800, %v864
    %v866 = vpop.f32.mrb[0].mxu0
    %867 = vmatprep.mubr.bf16.mxu0 0
    %868 = vmatmul.mubr.bf16.gmra.mrb[0].mxu0 %v353
    %v869 = vpop.f32.mrb[0].mxu0
    %v870 = vadd.f32 %v805, %v869
    %v871 = vpop.f32.mrb[0].mxu0
    %v872 = vpop.f32.mrb[0].mxu0
    %v873 = vadd.f32 %v808, %v872
    %v874 = vpop.f32.mrb[0].mxu0
    %875 = vdwg.mxu0
    %v876 = vtanh.pop %v846
    %v877 = vtanh.pop %v849
    %v878 = vtanh.pop %v854
    %v879 = vtanh.pop %v857
    %v880 = vtanh.pop %v862
    %v881 = vtanh.pop %v865
    %v882 = vtanh.pop %v870
    %v883 = vtanh.pop %v873
    %v884 = vld [vmem:[%s0] sm:$0xff]
    %v885 = vld [vmem:[%s0 + $0x8] sm:$0xff]
    %v886 = vld [vmem:[%s0 + $0x10] sm:$0xff]
    %v887 = vld [vmem:[%s1] sm:$0xff]
    %v888 = vld [vmem:[%s1 + $0x8] sm:$0xff]
    %v889 = vld [vmem:[%s1 + $0x10] sm:$0xff]
    %v890 = vlaneseq
    %v891 = vand.u32 %v890, 127
    %892 = vset.pattern.permute.xlu0 0
    %893 = vperm.xlu0 %892, %v884
    %v894 = vpop.permute.xlu0 %893
    %895 = vset.pattern.permute.xlu0 0
    %896 = vperm.xlu0 %895, %v885
    %v897 = vpop.permute.xlu0 %896
    %898 = vset.pattern.permute.xlu0 0
    %899 = vperm.xlu0 %898, %v886
    %v900 = vpop.permute.xlu0 %899
    %vm901 = vcmp.ge.s32.totalorder %v891, %v894
    %vm902 = vcmp.ge.s32.totalorder %v891, %v897
    %vm903 = vcmp.ge.s32.totalorder %v891, %v900
    %904 = vset.pattern.permute.xlu0 0
    %905 = vperm.xlu0 %904, %v887
    %v906 = vpop.permute.xlu0 %905
    %907 = vset.pattern.permute.xlu0 0
    %908 = vperm.xlu0 %907, %v888
    %v909 = vpop.permute.xlu0 %908
    %910 = vset.pattern.permute.xlu0 0
    %911 = vperm.xlu0 %910, %v889
    %v912 = vpop.permute.xlu0 %911
    %vm913 = vcmp.lt.s32.totalorder %v891, %v906
    %vm914 = vcmp.lt.s32.totalorder %v891, %v909
    %vm915 = vcmp.lt.s32.totalorder %v891, %v912
    %vm916 = vmand %vm901, %vm913
    %vm917 = vmand %vm902, %vm914
    %vm918 = vmand %vm903, %vm915
    %v919 = vsel %vm916, 1, 0
    %v920 = vsel %vm917, 1, 0
    %v921 = vsel %vm918, 1, 0
    %v922 = vcvt.s32.f32 %v919
    %v923 = vcvt.s32.f32 %v920
    %v924 = vcvt.s32.f32 %v921
    %v925 = vsub.s32 %v887, %v884
    %v926 = vsub.s32 %v888, %v885
    %v927 = vsub.s32 %v889, %v886
    %v928 = vcvt.s32.f32 %v925
    %v929 = vcvt.s32.f32 %v926
    %v930 = vcvt.s32.f32 %v927
    %vm931 = vcmp.gt.f32.partialorder %v928, 0.0
    %vm932 = vcmp.gt.f32.partialorder %v929, 0.0
    %vm933 = vcmp.gt.f32.partialorder %v930, 0.0
    %v934 = vrcp.pop %v928
    %v935 = vrcp.pop %v929
    %v936 = vrcp.pop %v930
    %v937 = vsel %vm931, %v934, 0.0
    %v938 = vsel %vm932, %v935, 0.0
    %v939 = vsel %vm933, %v936, 0.0
    %vm940 = vcmask 523264
    %v942 = vsel %vm940, %v922, 0
    %v945 = vsel %vm940, %v923, 0
    %v948 = vsel %vm940, %v924, 0
    %950 = vmatprep.subr.mxu0 0.0
    %951 = vmatpush1.msra.mxu0 %v876
    %952 = vmatprep.subr.mxu0 0.0
    %953 = vmatpush1.msra.mxu0 %v877
    %954 = vmatprep.subr.mxu0 0.0
    %955 = vmatpush1.msra.mxu0 %v878
    %956 = vmatprep.subr.mxu0 0.0
    %957 = vmatpush1.msra.mxu0 %v879
    %958 = vmatprep.subr.mxu0 0.0
    %959 = vmatpush1.msra.mxu0 %v880
    %960 = vmatprep.subr.mxu0 0.0
    %961 = vmatpush1.msra.mxu0 %v881
    %962 = vmatprep.subr.mxu0 0.0
    %963 = vmatpush1.msra.mxu0 %v882
    %964 = vmatprep.subr.mxu0 0.0
    %965 = vmatpush1.msra.mxu0 %v883
    %966 = vmatprep.subr.mxu0 0.0
    %967 = vmatpush1.msra.mxu0 0.0
    %968 = vmatprep.subr.mxu0 0.0
    %969 = vmatpush1.msra.mxu0 0.0
    %970 = vmatprep.subr.mxu0 0.0
    %971 = vmatpush1.msra.mxu0 0.0
    %972 = vmatprep.subr.mxu0 0.0
    %973 = vmatpush1.msra.mxu0 0.0
    %974 = vmatprep.subr.mxu0 0.0
    %975 = vmatpush1.msra.mxu0 0.0
    %976 = vmatprep.subr.mxu0 0.0
    %977 = vmatpush1.msra.mxu0 0.0
    %978 = vmatprep.subr.mxu0 0.0
    %979 = vmatpush1.msra.mxu0 0.0
    %980 = vmatprep.subr.mxu0 0.0
    %981 = vmatpush1.msra.mxu0 0.0
    %982 = vmatprep.subr.mxu0 0.0
    %983 = vmatpush1.msra.mxu0 0.0
    %984 = vmatprep.subr.mxu0 0.0
    %985 = vmatpush1.msra.mxu0 0.0
    %986 = vmatprep.subr.mxu0 0.0
    %987 = vmatpush1.msra.mxu0 0.0
    %988 = vmatprep.subr.mxu0 0.0
    %989 = vmatpush1.msra.mxu0 0.0
    %990 = vmatprep.subr.mxu0 0.0
    %991 = vmatpush1.msra.mxu0 0.0
    %992 = vmatprep.subr.mxu0 0.0
    %993 = vmatpush1.msra.mxu0 0.0
    %994 = vmatprep.subr.mxu0 0.0
    %995 = vmatpush1.msra.mxu0 0.0
    %996 = vmatprep.subr.mxu0 0.0
    %997 = vmatpush1.msra.mxu0 0.0
    %998 = vmatprep.subr.mxu0 0.0
    %999 = vmatpush1.msra.mxu0 0.0
    %1000 = vmatprep.subr.mxu0 0.0
    %1001 = vmatpush1.msra.mxu0 0.0
    %1002 = vmatprep.subr.mxu0 0.0
    %1003 = vmatpush1.msra.mxu0 0.0
    %1004 = vmatprep.subr.mxu0 0.0
    %1005 = vmatpush1.msra.mxu0 0.0
    %1006 = vmatprep.subr.mxu0 0.0
    %1007 = vmatpush1.msra.mxu0 0.0
    %1008 = vmatprep.subr.mxu0 0.0
    %1009 = vmatpush1.msra.mxu0 0.0
    %1010 = vmatprep.subr.mxu0 0.0
    %1011 = vmatpush1.msra.mxu0 0.0
    %1012 = vmatprep.subr.mxu0 0.0
    %1013 = vmatpush1.msra.mxu0 0.0
    %1014 = vmatprep.mubr.f32.mxu0 0.0
    %1015 = vmatmul.mubr.f32.gmra.mrb[0].mxu0 %v942
    %v1016 = vpop.f32.mrb[0].mxu0
    %v1017 = vadd.f32 0.0, %v1016
    %v1018 = vpop.f32.mrb[0].mxu0
    %1019 = vmatprep.mubr.f32.mxu0 0.0
    %1020 = vmatmul.mubr.f32.gmra.mrb[0].mxu0 %v945
    %v1021 = vpop.f32.mrb[0].mxu0
    %v1022 = vadd.f32 0.0, %v1021
    %v1023 = vpop.f32.mrb[0].mxu0
    %1024 = vmatprep.mubr.f32.mxu0 0.0
    %1025 = vmatmul.mubr.f32.gmra.mrb[0].mxu0 %v948
    %v1026 = vpop.f32.mrb[0].mxu0
    %v1027 = vadd.f32 0.0, %v1026
    %v1028 = vpop.f32.mrb[0].mxu0
    %1029 = vdwg.mxu0
    %1031 = vset.pattern.permute.xlu0 0
    %1032 = vperm.xlu0 %1031, %v937
    %v1033 = vpop.permute.xlu0 %1032
    %1036 = vset.pattern.permute.xlu0 0
    %1037 = vperm.xlu0 %1036, %v938
    %v1038 = vpop.permute.xlu0 %1037
    %1041 = vset.pattern.permute.xlu0 0
    %1042 = vperm.xlu0 %1041, %v939
    %v1043 = vpop.permute.xlu0 %1042
    %v1045 = vmul.f32 %v1017, %v1033
    %v1046 = vmul.f32 %v1022, %v1038
    %v1047 = vmul.f32 %v1027, %v1043
    %v1048 = vld [vmem:[%s3] sm:$0xf]
    %v1049 = vld [vmem:[%s6] sm:$0xff]
    %v1050 = vld [vmem:[%s6 + $0x8] sm:$0xff]
    %v1051 = vld [vmem:[%s6 + $0x10] sm:$0xff]
    %v1052 = vld [vmem:[%s6 + $0x18] sm:$0xff]
    %v1053 = vld [vmem:[%s6 + $0x20] sm:$0xff]
    %v1054 = vld [vmem:[%s6 + $0x28] sm:$0xff]
    %v1055 = vld [vmem:[%s6 + $0x30] sm:$0xff]
    %v1056 = vld [vmem:[%s6 + $0x38] sm:$0xff]
    %v1057 = vld [vmem:[%s6 + $0x40] sm:$0xff]
    %v1058 = vld [vmem:[%s6 + $0x48] sm:$0xff]
    %v1059 = vld [vmem:[%s6 + $0x50] sm:$0xff]
    %v1060 = vld [vmem:[%s6 + $0x58] sm:$0xff]
    %v1061 = vld [vmem:[%s6 + $0x60] sm:$0xff]
    %v1062 = vld [vmem:[%s6 + $0x68] sm:$0xff]
    %v1063 = vld [vmem:[%s6 + $0x70] sm:$0xff]
    %v1064 = vld [vmem:[%s6 + $0x78] sm:$0xff]
    %v1065 = vld [vmem:[%s6 + $0x80] sm:$0xff]
    %v1066 = vld [vmem:[%s6 + $0x88] sm:$0xff]
    %v1067 = vld [vmem:[%s6 + $0x90] sm:$0xff]
    %v1068 = vld [vmem:[%s6 + $0x98] sm:$0xff]
    %v1069 = vld [vmem:[%s6 + $0xa0] sm:$0xff]
    %v1070 = vld [vmem:[%s6 + $0xa8] sm:$0xff]
    %v1071 = vld [vmem:[%s6 + $0xb0] sm:$0xff]
    %v1072 = vld [vmem:[%s6 + $0xb8] sm:$0xff]
    %v1073 = vld [vmem:[%s6 + $0xc0] sm:$0xff]
    %v1074 = vld [vmem:[%s6 + $0xc8] sm:$0xff]
    %v1075 = vld [vmem:[%s6 + $0xd0] sm:$0xff]
    %v1076 = vld [vmem:[%s6 + $0xd8] sm:$0xff]
    %v1077 = vld [vmem:[%s6 + $0xe0] sm:$0xff]
    %v1078 = vld [vmem:[%s6 + $0xe8] sm:$0xff]
    %v1079 = vld [vmem:[%s6 + $0xf0] sm:$0xff]
    %v1080 = vld [vmem:[%s6 + $0xf8] sm:$0xff]
    %v1081 = vld [vmem:[%s6 + $0x100] sm:$0xff]
    %v1082 = vld [vmem:[%s6 + $0x108] sm:$0xff]
    %v1083 = vld [vmem:[%s6 + $0x110] sm:$0xff]
    %v1084 = vld [vmem:[%s6 + $0x118] sm:$0xff]
    %v1085 = vld [vmem:[%s6 + $0x120] sm:$0xff]
    %v1086 = vld [vmem:[%s6 + $0x128] sm:$0xff]
    %v1087 = vld [vmem:[%s6 + $0x130] sm:$0xff]
    %v1088 = vld [vmem:[%s6 + $0x138] sm:$0xff]
    %v1089 = vld [vmem:[%s6 + $0x140] sm:$0xff]
    %v1090 = vld [vmem:[%s6 + $0x148] sm:$0xff]
    %v1091 = vld [vmem:[%s6 + $0x150] sm:$0xff]
    %v1092 = vld [vmem:[%s6 + $0x158] sm:$0xff]
    %v1093 = vld [vmem:[%s6 + $0x160] sm:$0xff]
    %v1094 = vld [vmem:[%s6 + $0x168] sm:$0xff]
    %v1095 = vld [vmem:[%s6 + $0x170] sm:$0xff]
    %v1096 = vld [vmem:[%s6 + $0x178] sm:$0xff]
    %v1097 = vld [vmem:[%s6 + $0x180] sm:$0xff]
    %v1098 = vld [vmem:[%s6 + $0x188] sm:$0xff]
    %v1099 = vld [vmem:[%s6 + $0x190] sm:$0xff]
    %v1100 = vld [vmem:[%s6 + $0x198] sm:$0xff]
    %v1101 = vld [vmem:[%s6 + $0x1a0] sm:$0xff]
    %v1102 = vld [vmem:[%s6 + $0x1a8] sm:$0xff]
    %v1103 = vld [vmem:[%s6 + $0x1b0] sm:$0xff]
    %v1104 = vld [vmem:[%s6 + $0x1b8] sm:$0xff]
    %v1105 = vld [vmem:[%s6 + $0x1c0] sm:$0xff]
    %v1106 = vld [vmem:[%s6 + $0x1c8] sm:$0xff]
    %v1107 = vld [vmem:[%s6 + $0x1d0] sm:$0xff]
    %v1108 = vld [vmem:[%s6 + $0x1d8] sm:$0xff]
    %v1109 = vld [vmem:[%s6 + $0x1e0] sm:$0xff]
    %v1110 = vld [vmem:[%s6 + $0x1e8] sm:$0xff]
    %v1111 = vld [vmem:[%s6 + $0x1f0] sm:$0xff]
    %v1112 = vld [vmem:[%s6 + $0x1f8] sm:$0xff]
    %v1113 = vld [vmem:[%s7] sm:$0x1]
    %v1115 = vlaneseq
    %v1116 = vshrl.u32 %v1115, 7
    %v1117 = vsub.s32 0, %v1116
    %v1118 = vrot.slane %v1113, %v1117
    %1120 = vmatprep.subr.mxu0 0.0
    %1121 = vmatpush1.msra.mxu0 %v1049
    %1122 = vmatprep.subr.mxu0 0.0
    %1123 = vmatpush1.msra.mxu0 %v1050
    %1124 = vmatprep.subr.mxu0 0.0
    %1125 = vmatpush1.msra.mxu0 %v1051
    %1126 = vmatprep.subr.mxu0 0.0
    %1127 = vmatpush1.msra.mxu0 %v1052
    %1128 = vmatprep.subr.mxu0 0.0
    %1129 = vmatpush1.msra.mxu0 %v1053
    %1130 = vmatprep.subr.mxu0 0.0
    %1131 = vmatpush1.msra.mxu0 %v1054
    %1132 = vmatprep.subr.mxu0 0.0
    %1133 = vmatpush1.msra.mxu0 %v1055
    %1134 = vmatprep.subr.mxu0 0.0
    %1135 = vmatpush1.msra.mxu0 %v1056
    %1136 = vmatprep.subr.mxu0 0.0
    %1137 = vmatpush1.msra.mxu0 %v1057
    %1138 = vmatprep.subr.mxu0 0.0
    %1139 = vmatpush1.msra.mxu0 %v1058
    %1140 = vmatprep.subr.mxu0 0.0
    %1141 = vmatpush1.msra.mxu0 %v1059
    %1142 = vmatprep.subr.mxu0 0.0
    %1143 = vmatpush1.msra.mxu0 %v1060
    %1144 = vmatprep.subr.mxu0 0.0
    %1145 = vmatpush1.msra.mxu0 %v1061
    %1146 = vmatprep.subr.mxu0 0.0
    %1147 = vmatpush1.msra.mxu0 %v1062
    %1148 = vmatprep.subr.mxu0 0.0
    %1149 = vmatpush1.msra.mxu0 %v1063
    %1150 = vmatprep.subr.mxu0 0.0
    %1151 = vmatpush1.msra.mxu0 %v1064
    %1152 = vmatprep.subr.mxu0 0.0
    %1153 = vmatpush1.msra.mxu0 %v1065
    %1154 = vmatprep.subr.mxu0 0.0
    %1155 = vmatpush1.msra.mxu0 %v1066
    %1156 = vmatprep.subr.mxu0 0.0
    %1157 = vmatpush1.msra.mxu0 %v1067
    %1158 = vmatprep.subr.mxu0 0.0
    %1159 = vmatpush1.msra.mxu0 %v1068
    %1160 = vmatprep.subr.mxu0 0.0
    %1161 = vmatpush1.msra.mxu0 %v1069
    %1162 = vmatprep.subr.mxu0 0.0
    %1163 = vmatpush1.msra.mxu0 %v1070
    %1164 = vmatprep.subr.mxu0 0.0
    %1165 = vmatpush1.msra.mxu0 %v1071
    %1166 = vmatprep.subr.mxu0 0.0
    %1167 = vmatpush1.msra.mxu0 %v1072
    %1168 = vmatprep.subr.mxu0 0.0
    %1169 = vmatpush1.msra.mxu0 %v1073
    %1170 = vmatprep.subr.mxu0 0.0
    %1171 = vmatpush1.msra.mxu0 %v1074
    %1172 = vmatprep.subr.mxu0 0.0
    %1173 = vmatpush1.msra.mxu0 %v1075
    %1174 = vmatprep.subr.mxu0 0.0
    %1175 = vmatpush1.msra.mxu0 %v1076
    %1176 = vmatprep.subr.mxu0 0.0
    %1177 = vmatpush1.msra.mxu0 %v1077
    %1178 = vmatprep.subr.mxu0 0.0
    %1179 = vmatpush1.msra.mxu0 %v1078
    %1180 = vmatprep.subr.mxu0 0.0
    %1181 = vmatpush1.msra.mxu0 %v1079
    %1182 = vmatprep.subr.mxu0 0.0
    %1183 = vmatpush1.msra.mxu0 %v1080
    %1184 = vmatprep.mubr.f32.mxu0 %v1045
    %1185 = vmatmul.mubr.f32.gmra.mrb[0].mxu0 %v1048
    %v1186 = vpop.f32.mrb[0].mxu0
    %v1187 = vadd.f32 %v1118, %v1186
    %v1188 = vpop.f32.mrb[0].mxu0
    %1189 = vdwg.mxu0
    %1190 = vmatprep.subr.mxu0 0.0
    %1191 = vmatpush1.msra.mxu0 %v1081
    %1192 = vmatprep.subr.mxu0 0.0
    %1193 = vmatpush1.msra.mxu0 %v1082
    %1194 = vmatprep.subr.mxu0 0.0
    %1195 = vmatpush1.msra.mxu0 %v1083
    %1196 = vmatprep.subr.mxu0 0.0
    %1197 = vmatpush1.msra.mxu0 %v1084
    %1198 = vmatprep.subr.mxu0 0.0
    %1199 = vmatpush1.msra.mxu0 %v1085
    %1200 = vmatprep.subr.mxu0 0.0
    %1201 = vmatpush1.msra.mxu0 %v1086
    %1202 = vmatprep.subr.mxu0 0.0
    %1203 = vmatpush1.msra.mxu0 %v1087
    %1204 = vmatprep.subr.mxu0 0.0
    %1205 = vmatpush1.msra.mxu0 %v1088
    %1206 = vmatprep.subr.mxu0 0.0
    %1207 = vmatpush1.msra.mxu0 %v1089
    %1208 = vmatprep.subr.mxu0 0.0
    %1209 = vmatpush1.msra.mxu0 %v1090
    %1210 = vmatprep.subr.mxu0 0.0
    %1211 = vmatpush1.msra.mxu0 %v1091
    %1212 = vmatprep.subr.mxu0 0.0
    %1213 = vmatpush1.msra.mxu0 %v1092
    %1214 = vmatprep.subr.mxu0 0.0
    %1215 = vmatpush1.msra.mxu0 %v1093
    %1216 = vmatprep.subr.mxu0 0.0
    %1217 = vmatpush1.msra.mxu0 %v1094
    %1218 = vmatprep.subr.mxu0 0.0
    %1219 = vmatpush1.msra.mxu0 %v1095
    %1220 = vmatprep.subr.mxu0 0.0
    %1221 = vmatpush1.msra.mxu0 %v1096
    %1222 = vmatprep.subr.mxu0 0.0
    %1223 = vmatpush1.msra.mxu0 %v1097
    %1224 = vmatprep.subr.mxu0 0.0
    %1225 = vmatpush1.msra.mxu0 %v1098
    %1226 = vmatprep.subr.mxu0 0.0
    %1227 = vmatpush1.msra.mxu0 %v1099
    %1228 = vmatprep.subr.mxu0 0.0
    %1229 = vmatpush1.msra.mxu0 %v1100
    %1230 = vmatprep.subr.mxu0 0.0
    %1231 = vmatpush1.msra.mxu0 %v1101
    %1232 = vmatprep.subr.mxu0 0.0
    %1233 = vmatpush1.msra.mxu0 %v1102
    %1234 = vmatprep.subr.mxu0 0.0
    %1235 = vmatpush1.msra.mxu0 %v1103
    %1236 = vmatprep.subr.mxu0 0.0
    %1237 = vmatpush1.msra.mxu0 %v1104
    %1238 = vmatprep.subr.mxu0 0.0
    %1239 = vmatpush1.msra.mxu0 %v1105
    %1240 = vmatprep.subr.mxu0 0.0
    %1241 = vmatpush1.msra.mxu0 %v1106
    %1242 = vmatprep.subr.mxu0 0.0
    %1243 = vmatpush1.msra.mxu0 %v1107
    %1244 = vmatprep.subr.mxu0 0.0
    %1245 = vmatpush1.msra.mxu0 %v1108
    %1246 = vmatprep.subr.mxu0 0.0
    %1247 = vmatpush1.msra.mxu0 %v1109
    %1248 = vmatprep.subr.mxu0 0.0
    %1249 = vmatpush1.msra.mxu0 %v1110
    %1250 = vmatprep.subr.mxu0 0.0
    %1251 = vmatpush1.msra.mxu0 %v1111
    %1252 = vmatprep.subr.mxu0 0.0
    %1253 = vmatpush1.msra.mxu0 %v1112
    %1254 = vmatprep.mubr.f32.mxu0 %v1047
    %1255 = vmatmul.mubr.f32.gmra.mrb[0].mxu0 %v1046
    %v1256 = vpop.f32.mrb[0].mxu0
    %v1257 = vadd.f32 %v1187, %v1256
    %v1258 = vpop.f32.mrb[0].mxu0
    %1259 = vdwg.mxu0
    %vm1260 = vcmask 1043456
    %v1261 = vsel %vm1260, %v1257, -inf
    %1262 = vmax.xlane.f32.xlu0 %v1261
    %v1263 = vpop.xlane.xlu0 %1262
    %v1264 = vsub.f32 %v1257, %v1263
    %v1265 = vmul.f32 %v1264, 1.442695
    %v1266 = vpow.pop %v1265
    %v1267 = vsel %vm1260, %v1266, 0.0
    %1268 = vadd.xlane.f32.xlu0 %v1267
    %v1269 = vpop.xlane.xlu0 %1268
    %v1270 = vrcp.pop %v1269
    %v1271 = vmul.f32 %v1266, %v1270
    %1272 = vst [vmem:[#allocation3] sm:$0xf] %v1271
    // Predicated region
    $region34: #{cnn_forward.1} parent=1 // pred_check
      _
    $region35: #{cnn_forward.1} parent=1 // pred_check_branch
      %1274 = sbr.rel (0) target = $region37
    $region36: #{cnn_forward.1} parent=1 // pred_region
      %s1276 = ssub.s32 64, 64
      %1277 = vsyncadd [#allocation4], %s1276
      %s1279 = sshll.u32 [#allocation3], 4
      %s1280 = int_to_ptr.vmem [resolvable:$true] %s1279
      %1282 = dma.vmem_to_hbm [thread:$0]  %s1280, 64, %s8, [#allocation4]
    $region37: #{cnn_forward.1} parent=1 // pred_fallthru
      _
    // Predicated region
    $region38: #{cnn_forward.1} parent=1 // pred_check
      _
    $region39: #{cnn_forward.1} parent=1 // pred_check_branch
      %1284 = sbr.rel (0) target = $region41
    $region40: #{cnn_forward.1} parent=1 // pred_region
      %1285 = dma.done [#allocation4], 64
    $region41: #{cnn_forward.1} parent=1 // pred_fallthru
      _
    %1286 = vsyncpa [#allocation4], 1

</llo_original>
